<compile_context>
chip_gen: v7x
topology: tpu7x:2x2x1
jax: 0.10.0
libtpu: 0.0.40
codegen_flags: <defaults>
</compile_context>

<pallas_src>
import math
import functools

import jax
import jax.numpy as jnp
from jax import lax
from jax.experimental import pallas as pl
from jax.experimental.pallas import tpu as pltpu


# ----------------------------------------------------------------------------
# Kernel: (expand-linear -> rearrange -> layernorm) for one (batch, h-block)
# ----------------------------------------------------------------------------
def _expand_rearrange_ln_kernel(x_ref, w_ref, p_ref, g_ref, b_ref, o_ref, *,
                                eps, p):
    # x_ref : (TH, W, C)        input rows for this (batch, h-block)
    # w_ref : (C, p*p*C)        expand weight, per-segment mean already folded in
    # p_ref : (p*C, p*C)        block-diagonal 1/C averaging matrix (f32)
    # g_ref : (1, p*C)          gamma tiled p times (f32)
    # b_ref : (1, p*C)          beta  tiled p times (f32)
    # o_ref : (TH, p, W, p*C)   output block ((B,H,p,W,p*C) == view of (B,pH,pW,C))
    TH, W, C = x_ref.shape
    PC = p_ref.shape[0]

    x2 = x_ref[...].reshape(TH * W, C).astype(w_ref.dtype)     # bf16 for the MXU
    # Weight is pre-centered per C-wide segment, so this matmul produces y - mean.
    yc = jnp.dot(x2, w_ref[...], preferred_element_type=jnp.float32)   # (M, p*PC) f32

    g = g_ref[...]
    b = b_ref[...]
    pmat = p_ref[...]
    for p1 in range(p):                                        # static unroll (4)
        yc_p = yc[:, p1 * PC:(p1 + 1) * PC]                    # aligned 128-lane slice
        # per-segment variance broadcast back over the segment (f32, block-diag MXU)
        var_b = jnp.dot(yc_p * yc_p, pmat, preferred_element_type=jnp.float32)
        out = (yc_p * lax.rsqrt(var_b + eps)) * g + b          # fused epilogue
        o_ref[:, pl.ds(p1, 1), :, :] = (
            out.reshape(TH, 1, W, PC).astype(o_ref.dtype))


# ----------------------------------------------------------------------------
# Host-side (once-per-model) parameter preparation
# ----------------------------------------------------------------------------
def prepare_final_patch_expand_x4(w_expand, gamma, beta, *, dim_scale=4,
                                  matmul_dtype=jnp.bfloat16):
    """Fold the per-segment mean into the weight, cast it for the MXU, build the
    block-diagonal variance matrix and the tiled affine parameters."""
    C = gamma.shape[0]
    p = dim_scale
    PC = p * C
    PPC = p * p * C
    assert w_expand.shape == (C, PPC), w_expand.shape

    w = w_expand.astype(jnp.float32).reshape(C, p * p, C)
    w_centered = (w - w.mean(axis=-1, keepdims=True)).reshape(C, PPC)
    w_centered = w_centered.astype(matmul_dtype)

    seg = jnp.arange(PC) // C
    P = (seg[:, None] == seg[None, :]).astype(jnp.float32) / C     # (PC, PC)

    g_t = jnp.tile(gamma.astype(jnp.float32), p).reshape(1, PC)
    b_t = jnp.tile(beta.astype(jnp.float32), p).reshape(1, PC)
    return w_centered, P, g_t, b_t


# ----------------------------------------------------------------------------
# Block sizing / VMEM budgeting
# ----------------------------------------------------------------------------
def _vmem_capacity_bytes():
    try:
        return int(pltpu.get_tpu_info().vmem_capacity_bytes)
    except Exception:
        return 64 << 20        # conservative fallback (v7x per-TC VMEM)


def _divisors(n):
    return [d for d in range(1, n + 1) if n % d == 0]


def _pick_block_h(B, H, W, p, PC, out_itemsize, vmem_block_budget,
                  target_rows=1024):
    """Largest divisor of H whose double-buffered blocks fit the budget.

    Sized from the OUTPUT block (16x the input); x's lane padding (C < 128)
    is counted explicitly.  Avoids the 'decrement until it divides' trap.
    """
    out_row = p * W * PC * out_itemsize            # output bytes per h-row
    x_row = W * 128 * 4                            # x bytes per h-row (lane-padded f32)
    per_row = 2 * (out_row + x_row)                # double-buffered
    cap_vmem = max(1, vmem_block_budget // per_row)
    cap_rows = max(1, target_rows // max(W, 1))
    cap = max(1, min(H, cap_vmem, cap_rows))
    divs = _divisors(H)
    bh = max(d for d in divs if d <= cap)
    # v7x megacore: keep at least 2 parallel grid steps when possible.
    if B * (H // bh) < 2:
        smaller = [d for d in divs if d < bh]
        if smaller:
            bh = max(smaller)
    return bh


# ----------------------------------------------------------------------------
# Wrapper
# ----------------------------------------------------------------------------
def final_patch_expand_x4(x, params, *, dim_scale=4, eps=1e-5, block_h=None,
                          out_dtype=None):
    """x: (B, H, W, C); params from prepare_final_patch_expand_x4()."""
    w_c, P, g_t, b_t = params
    B, H, W, C = x.shape
    p = dim_scale
    PC = p * C
    PPC = p * p * C
    assert w_c.shape == (C, PPC), w_c.shape
    assert P.shape == (PC, PC)

    out_dtype = x.dtype if out_dtype is None else out_dtype
    out_isize = jnp.dtype(out_dtype).itemsize

    vmem_cap = _vmem_capacity_bytes()
    if block_h is None:
        block_h = _pick_block_h(B, H, W, p, PC, out_isize,
                                vmem_block_budget=vmem_cap // 3)
    assert H % block_h == 0

    # explicit VMEM limit: double-buffered x/out blocks + resident weights/stats
    out_block = block_h * p * W * PC * out_isize
    x_block = block_h * W * 128 * 4
    const_bytes = C * PPC * w_c.dtype.itemsize + PC * PC * 4 + 2 * 8 * PC * 4
    needed = 2 * (out_block + x_block + const_bytes)
    vmem_limit = int(min(int(vmem_cap * 0.9),
                         max(32 << 20, int(needed * 1.5) + (4 << 20))))

    grid = (B, H // block_h)

    out5 = pl.pallas_call(
        functools.partial(_expand_rearrange_ln_kernel, eps=eps, p=p),
        out_shape=jax.ShapeDtypeStruct((B, H, p, W, PC), out_dtype),
        grid=grid,
        in_specs=[
            pl.BlockSpec((None, block_h, W, C), lambda b, hb: (b, hb, 0, 0)),
            pl.BlockSpec((C, PPC), lambda b, hb: (0, 0)),
            pl.BlockSpec((PC, PC), lambda b, hb: (0, 0)),
            pl.BlockSpec((1, PC), lambda b, hb: (0, 0)),
            pl.BlockSpec((1, PC), lambda b, hb: (0, 0)),
        ],
        out_specs=pl.BlockSpec((None, block_h, p, W, PC),
                               lambda b, hb: (b, hb, 0, 0, 0)),
        compiler_params=pltpu.CompilerParams(
            dimension_semantics=("parallel", "parallel"),
            vmem_limit_bytes=vmem_limit),
    )(x, w_c, P, g_t, b_t)

    # (B, H, p, W, p*C) -> (B, p*H, p*W, C): contiguous, free view
    return out5.reshape(B, p * H, p * W, C)


# ----------------------------------------------------------------------------
# pure-JAX reference (mirrors the PyTorch module)
# ----------------------------------------------------------------------------
def reference_forward(x, w_expand, gamma, beta, *, dim_scale=4, eps=1e-5):
    B, H, W, C = x.shape
    p = dim_scale
    y = x @ w_expand                                          # (B, H, W, p*p*C)
    y = y.reshape(B, H, W, p, p, C).transpose(0, 1, 3, 2, 4, 5)
    y = y.reshape(B, H * p, W * p, C)
    mu = y.mean(-1, keepdims=True)
    var = ((y - mu) ** 2).mean(-1, keepdims=True)
    return (y - mu) / jnp.sqrt(var + eps) * gamma + beta


# ----------------------------------------------------------------------------
if __name__ == "__main__":
    key = jax.random.PRNGKey(0)
    B, H, W, C = 2, 16, 16, 32          # (batch, H, W, dim); dim_scale = 4
    p = 4

    kx, kw, kg, kb = jax.random.split(key, 4)
    x = jax.random.normal(kx, (B, H, W, C), jnp.float32)
    # torch Linear(dim, 16*dim, bias=False).weight has shape (16*dim, dim);
    # we store its transpose (dim, 16*dim) so the kernel does x @ W_e directly.
    w_expand = jax.random.normal(kw, (C, p * p * C), jnp.float32) / math.sqrt(C)
    gamma = 1.0 + 0.1 * jax.random.normal(kg, (C,), jnp.float32)
    beta = 0.1 * jax.random.normal(kb, (C,), jnp.float32)

    ref = reference_forward(x, w_expand, gamma, beta, dim_scale=p, eps=1e-5)

    # production path: bf16 matmul operands, f32 stats / epilogue
    params_bf16 = prepare_final_patch_expand_x4(
        w_expand, gamma, beta, dim_scale=p, matmul_dtype=jnp.bfloat16)
    out = final_patch_expand_x4(x, params_bf16, dim_scale=p, eps=1e-5)
    out = jax.block_until_ready(out)
    assert out.shape == (B, p * H, p * W, C), out.shape
    assert bool(jnp.all(jnp.isfinite(out)))
    assert bool(jnp.allclose(out, ref, atol=5e-2, rtol=5e-2)), \
        float(jnp.max(jnp.abs(out - ref)))

    # strict numerical check: same kernel with f32 matmul operands
    params_f32 = prepare_final_patch_expand_x4(
        w_expand, gamma, beta, dim_scale=p, matmul_dtype=jnp.float32)
    out32 = jax.block_until_ready(
        final_patch_expand_x4(x, params_f32, dim_scale=p, eps=1e-5))
    assert bool(jnp.allclose(out32, ref, atol=1e-3, rtol=1e-3)), \
        float(jnp.max(jnp.abs(out32 - ref)))

    print("KERNEL_OK")
</pallas_src>

<mosaic_0001>
module attributes {stable_mosaic.version = 11 : i64} {
  func.func @_expand_rearrange_ln_kernel(%arg0: i32, %arg1: i32, %arg2: memref<1x16x16x32xf32, #tpu.memory_space<vmem>>, %arg3: memref<32x512xbf16, #tpu.memory_space<vmem>>, %arg4: memref<128x128xf32, #tpu.memory_space<vmem>>, %arg5: memref<1x128xf32, #tpu.memory_space<vmem>>, %arg6: memref<1x128xf32, #tpu.memory_space<vmem>>, %arg7: memref<1x16x4x16x128xf32, #tpu.memory_space<vmem>>) attributes {dimension_semantics = [#tpu.dimension_semantics<parallel>, #tpu.dimension_semantics<parallel>], iteration_bounds = array<i64: 2, 1>, scalar_prefetch = 0 : i64, scratch_operands = 0 : i64, tpu.core_type = #tpu.core_type<tc>, window_params = [{transform_indices = @transform_0, window_bounds = array<i64: 1, 16, 16, 32>}, {pipeline_mode = #tpu.pipeline_mode<synchronous>, transform_indices = @transform_1, window_bounds = array<i64: 32, 512>}, {pipeline_mode = #tpu.pipeline_mode<synchronous>, transform_indices = @transform_2, window_bounds = array<i64: 128, 128>}, {pipeline_mode = #tpu.pipeline_mode<synchronous>, transform_indices = @transform_3, window_bounds = array<i64: 1, 128>}, {pipeline_mode = #tpu.pipeline_mode<synchronous>, transform_indices = @transform_4, window_bounds = array<i64: 1, 128>}, {transform_indices = @transform_5, window_bounds = array<i64: 1, 16, 4, 16, 128>}]} {
    %c0 = arith.constant 0 : index
    %c0_0 = arith.constant 0 : index
    %c0_1 = arith.constant 0 : index
    %c0_2 = arith.constant 0 : index
    %0 = vector.load %arg2[%c0, %c0_0, %c0_1, %c0_2] : memref<1x16x16x32xf32, #tpu.memory_space<vmem>>, vector<1x16x16x32xf32>
    %1 = vector.shape_cast %0 : vector<1x16x16x32xf32> to vector<16x16x32xf32>
    %2 = vector.shape_cast %1 : vector<16x16x32xf32> to vector<256x32xf32>
    %3 = arith.truncf %2 : vector<256x32xf32> to vector<256x32xbf16>
    %c0_3 = arith.constant 0 : index
    %c0_4 = arith.constant 0 : index
    %4 = vector.load %arg3[%c0_3, %c0_4] : memref<32x512xbf16, #tpu.memory_space<vmem>>, vector<32x512xbf16>
    %cst = arith.constant dense<0.000000e+00> : vector<256x512xf32>
    %5 = tpu.matmul %3, %4, %cst {dimension_numbers = #tpu.dot_dimension_numbers<[1], [0], [0], [1], [0, 0, 1, 1], [], []>} : vector<256x32xbf16>, vector<32x512xbf16>, vector<256x512xf32> -> vector<256x512xf32>
    %c0_5 = arith.constant 0 : index
    %c0_6 = arith.constant 0 : index
    %6 = vector.load %arg5[%c0_5, %c0_6] : memref<1x128xf32, #tpu.memory_space<vmem>>, vector<1x128xf32>
    %c0_7 = arith.constant 0 : index
    %c0_8 = arith.constant 0 : index
    %7 = vector.load %arg6[%c0_7, %c0_8] : memref<1x128xf32, #tpu.memory_space<vmem>>, vector<1x128xf32>
    %c0_9 = arith.constant 0 : index
    %c0_10 = arith.constant 0 : index
    %8 = vector.load %arg4[%c0_9, %c0_10] : memref<128x128xf32, #tpu.memory_space<vmem>>, vector<128x128xf32>
    %9 = vector.extract_strided_slice %5 {offsets = [0, 0], sizes = [256, 128], strides = [1, 1]} : vector<256x512xf32> to vector<256x128xf32>
    %10 = arith.mulf %9, %9 : vector<256x128xf32>
    %cst_11 = arith.constant dense<0.000000e+00> : vector<256x128xf32>
    %11 = tpu.matmul %10, %8, %cst_11 {dimension_numbers = #tpu.dot_dimension_numbers<[1], [0], [0], [1], [0, 0, 1, 1], [], []>} : vector<256x128xf32>, vector<128x128xf32>, vector<256x128xf32> -> vector<256x128xf32>
    %cst_12 = arith.constant 9.99999974E-6 : f32
    %12 = vector.broadcast %cst_12 : f32 to vector<256x128xf32>
    %13 = arith.addf %11, %12 : vector<256x128xf32>
    %14 = math.rsqrt %13 : vector<256x128xf32>
    %15 = arith.mulf %9, %14 : vector<256x128xf32>
    %16 = vector.broadcast %6 : vector<1x128xf32> to vector<256x128xf32>
    %17 = arith.mulf %15, %16 : vector<256x128xf32>
    %18 = vector.broadcast %7 : vector<1x128xf32> to vector<256x128xf32>
    %19 = arith.addf %17, %18 : vector<256x128xf32>
    %20 = vector.shape_cast %19 : vector<256x128xf32> to vector<16x1x16x128xf32>
    %c0_13 = arith.constant 0 : index
    %c0_14 = arith.constant 0 : index
    %c0_15 = arith.constant 0 : index
    %c0_16 = arith.constant 0 : index
    %c0_17 = arith.constant 0 : index
    %21 = vector.load %arg7[%c0_13, %c0_14, %c0_15, %c0_16, %c0_17] : memref<1x16x4x16x128xf32, #tpu.memory_space<vmem>>, vector<1x16x1x16x128xf32>
    %22 = vector.shape_cast %21 : vector<1x16x1x16x128xf32> to vector<16x1x16x128xf32>
    %23 = vector.shape_cast %20 : vector<16x1x16x128xf32> to vector<1x16x1x16x128xf32>
    tpu.vector_store %arg7[%c0_13, %c0_14, %c0_15, %c0_16, %c0_17], %23 {strides = array<i32>} : memref<1x16x4x16x128xf32, #tpu.memory_space<vmem>>, vector<1x16x1x16x128xf32>,
    %24 = vector.extract_strided_slice %5 {offsets = [0, 128], sizes = [256, 128], strides = [1, 1]} : vector<256x512xf32> to vector<256x128xf32>
    %25 = arith.mulf %24, %24 : vector<256x128xf32>
    %cst_18 = arith.constant dense<0.000000e+00> : vector<256x128xf32>
    %26 = tpu.matmul %25, %8, %cst_18 {dimension_numbers = #tpu.dot_dimension_numbers<[1], [0], [0], [1], [0, 0, 1, 1], [], []>} : vector<256x128xf32>, vector<128x128xf32>, vector<256x128xf32> -> vector<256x128xf32>
    %cst_19 = arith.constant 9.99999974E-6 : f32
    %27 = vector.broadcast %cst_19 : f32 to vector<256x128xf32>
    %28 = arith.addf %26, %27 : vector<256x128xf32>
    %29 = math.rsqrt %28 : vector<256x128xf32>
    %30 = arith.mulf %24, %29 : vector<256x128xf32>
    %31 = vector.broadcast %6 : vector<1x128xf32> to vector<256x128xf32>
    %32 = arith.mulf %30, %31 : vector<256x128xf32>
    %33 = vector.broadcast %7 : vector<1x128xf32> to vector<256x128xf32>
    %34 = arith.addf %32, %33 : vector<256x128xf32>
    %35 = vector.shape_cast %34 : vector<256x128xf32> to vector<16x1x16x128xf32>
    %c0_20 = arith.constant 0 : index
    %c0_21 = arith.constant 0 : index
    %c1 = arith.constant 1 : index
    %c0_22 = arith.constant 0 : index
    %c0_23 = arith.constant 0 : index
    %36 = vector.load %arg7[%c0_20, %c0_21, %c1, %c0_22, %c0_23] : memref<1x16x4x16x128xf32, #tpu.memory_space<vmem>>, vector<1x16x1x16x128xf32>
    %37 = vector.shape_cast %36 : vector<1x16x1x16x128xf32> to vector<16x1x16x128xf32>
    %38 = vector.shape_cast %35 : vector<16x1x16x128xf32> to vector<1x16x1x16x128xf32>
    tpu.vector_store %arg7[%c0_20, %c0_21, %c1, %c0_22, %c0_23], %38 {strides = array<i32>} : memref<1x16x4x16x128xf32, #tpu.memory_space<vmem>>, vector<1x16x1x16x128xf32>,
    %39 = vector.extract_strided_slice %5 {offsets = [0, 256], sizes = [256, 128], strides = [1, 1]} : vector<256x512xf32> to vector<256x128xf32>
    %40 = arith.mulf %39, %39 : vector<256x128xf32>
    %cst_24 = arith.constant dense<0.000000e+00> : vector<256x128xf32>
    %41 = tpu.matmul %40, %8, %cst_24 {dimension_numbers = #tpu.dot_dimension_numbers<[1], [0], [0], [1], [0, 0, 1, 1], [], []>} : vector<256x128xf32>, vector<128x128xf32>, vector<256x128xf32> -> vector<256x128xf32>
    %cst_25 = arith.constant 9.99999974E-6 : f32
    %42 = vector.broadcast %cst_25 : f32 to vector<256x128xf32>
    %43 = arith.addf %41, %42 : vector<256x128xf32>
    %44 = math.rsqrt %43 : vector<256x128xf32>
    %45 = arith.mulf %39, %44 : vector<256x128xf32>
    %46 = vector.broadcast %6 : vector<1x128xf32> to vector<256x128xf32>
    %47 = arith.mulf %45, %46 : vector<256x128xf32>
    %48 = vector.broadcast %7 : vector<1x128xf32> to vector<256x128xf32>
    %49 = arith.addf %47, %48 : vector<256x128xf32>
    %50 = vector.shape_cast %49 : vector<256x128xf32> to vector<16x1x16x128xf32>
    %c0_26 = arith.constant 0 : index
    %c0_27 = arith.constant 0 : index
    %c2 = arith.constant 2 : index
    %c0_28 = arith.constant 0 : index
    %c0_29 = arith.constant 0 : index
    %51 = vector.load %arg7[%c0_26, %c0_27, %c2, %c0_28, %c0_29] : memref<1x16x4x16x128xf32, #tpu.memory_space<vmem>>, vector<1x16x1x16x128xf32>
    %52 = vector.shape_cast %51 : vector<1x16x1x16x128xf32> to vector<16x1x16x128xf32>
    %53 = vector.shape_cast %50 : vector<16x1x16x128xf32> to vector<1x16x1x16x128xf32>
    tpu.vector_store %arg7[%c0_26, %c0_27, %c2, %c0_28, %c0_29], %53 {strides = array<i32>} : memref<1x16x4x16x128xf32, #tpu.memory_space<vmem>>, vector<1x16x1x16x128xf32>,
    %54 = vector.extract_strided_slice %5 {offsets = [0, 384], sizes = [256, 128], strides = [1, 1]} : vector<256x512xf32> to vector<256x128xf32>
    %55 = arith.mulf %54, %54 : vector<256x128xf32>
    %cst_30 = arith.constant dense<0.000000e+00> : vector<256x128xf32>
    %56 = tpu.matmul %55, %8, %cst_30 {dimension_numbers = #tpu.dot_dimension_numbers<[1], [0], [0], [1], [0, 0, 1, 1], [], []>} : vector<256x128xf32>, vector<128x128xf32>, vector<256x128xf32> -> vector<256x128xf32>
    %cst_31 = arith.constant 9.99999974E-6 : f32
    %57 = vector.broadcast %cst_31 : f32 to vector<256x128xf32>
    %58 = arith.addf %56, %57 : vector<256x128xf32>
    %59 = math.rsqrt %58 : vector<256x128xf32>
    %60 = arith.mulf %54, %59 : vector<256x128xf32>
    %61 = vector.broadcast %6 : vector<1x128xf32> to vector<256x128xf32>
    %62 = arith.mulf %60, %61 : vector<256x128xf32>
    %63 = vector.broadcast %7 : vector<1x128xf32> to vector<256x128xf32>
    %64 = arith.addf %62, %63 : vector<256x128xf32>
    %65 = vector.shape_cast %64 : vector<256x128xf32> to vector<16x1x16x128xf32>
    %c0_32 = arith.constant 0 : index
    %c0_33 = arith.constant 0 : index
    %c3 = arith.constant 3 : index
    %c0_34 = arith.constant 0 : index
    %c0_35 = arith.constant 0 : index
    %66 = vector.load %arg7[%c0_32, %c0_33, %c3, %c0_34, %c0_35] : memref<1x16x4x16x128xf32, #tpu.memory_space<vmem>>, vector<1x16x1x16x128xf32>
    %67 = vector.shape_cast %66 : vector<1x16x1x16x128xf32> to vector<16x1x16x128xf32>
    %68 = vector.shape_cast %65 : vector<16x1x16x128xf32> to vector<1x16x1x16x128xf32>
    tpu.vector_store %arg7[%c0_32, %c0_33, %c3, %c0_34, %c0_35], %68 {strides = array<i32>} : memref<1x16x4x16x128xf32, #tpu.memory_space<vmem>>, vector<1x16x1x16x128xf32>,
    return
  }
  func.func @transform_0(%arg0: i32, %arg1: i32) -> (i32, i32, i32, i32) {
    %c0_i32 = arith.constant 0 : i32
    %c0_i32_0 = arith.constant 0 : i32
    %c0_i32_1 = arith.constant 0 : i32
    return %arg0, %arg1, %c0_i32, %c0_i32_0 : i32, i32, i32, i32
  }
  func.func @transform_1(%arg0: i32, %arg1: i32) -> (i32, i32) {
    %c0_i32 = arith.constant 0 : i32
    %c0_i32_0 = arith.constant 0 : i32
    %c0_i32_1 = arith.constant 0 : i32
    return %c0_i32, %c0_i32_0 : i32, i32
  }
  func.func @transform_2(%arg0: i32, %arg1: i32) -> (i32, i32) {
    %c0_i32 = arith.constant 0 : i32
    %c0_i32_0 = arith.constant 0 : i32
    %c0_i32_1 = arith.constant 0 : i32
    return %c0_i32, %c0_i32_0 : i32, i32
  }
  func.func @transform_3(%arg0: i32, %arg1: i32) -> (i32, i32) {
    %c0_i32 = arith.constant 0 : i32
    %c0_i32_0 = arith.constant 0 : i32
    %c0_i32_1 = arith.constant 0 : i32
    return %c0_i32, %c0_i32_0 : i32, i32
  }
  func.func @transform_4(%arg0: i32, %arg1: i32) -> (i32, i32) {
    %c0_i32 = arith.constant 0 : i32
    %c0_i32_0 = arith.constant 0 : i32
    %c0_i32_1 = arith.constant 0 : i32
    return %c0_i32, %c0_i32_0 : i32, i32
  }
  func.func @transform_5(%arg0: i32, %arg1: i32) -> (i32, i32, i32, i32, i32) {
    %c0_i32 = arith.constant 0 : i32
    %c0_i32_0 = arith.constant 0 : i32
    %c0_i32_1 = arith.constant 0 : i32
    %c0_i32_2 = arith.constant 0 : i32
    return %arg0, %arg1, %c0_i32, %c0_i32_0, %c0_i32_1 : i32, i32, i32, i32, i32
  }
}

</mosaic_0001>

<llo_original>
// kernel: tpu_custom_call.1
$region0: #{tpu_custom_call.1}
  #allocation0 [shape = 'u32[]', space=smem, size = 0x4, offset = 0x4, fixed_abs, tag = 'smem constant byte address 0x4 - core index']
  #allocation1 [shape = 'u32[144,128]{1,0:T(1,128)}', space=vmem, size = 0x12000, scoped, tag = 'internal scratch']
  %s0 = inlined_call_operand.hbm [shape: f32[2,16,16,32], index: 0, kind: input, shape index: {}]
  %s1 = inlined_call_operand.hbm [shape: bf16[32,512], index: 1, kind: input, shape index: {}]
  %s2 = inlined_call_operand.hbm [shape: f32[128,128], index: 2, kind: input, shape index: {}]
  %s3 = inlined_call_operand.vmem [shape: f32[1,128], index: 3, kind: input, shape index: {}]
  %s4 = inlined_call_operand.vmem [shape: f32[1,128], index: 4, kind: input, shape index: {}]
  %s5 = inlined_call_operand.hbm [shape: f32[2,16,4,16,128], index: 5, kind: output, shape index: {}]
  %s6 = sld [smem:[#allocation0]]
  $region65: #{tpu_custom_call.1} parent=0
    _
  %s8 = ssub.s32 1, %s6
  %s9 = scalar_select 0, %s8, %s6
  $region1: #{tpu_custom_call.1} parent=0
    #allocation2 [shape = 'u8[262144]{0}', space=vmem, size = 0x40000, scoped, tag = 'input window, operand 0']
    #allocation3 [shape = 's32[2]{0}', space=sflag, size = 0x8, scoped, tag = 'scoped memory for tpu_custom_call.1']
    #allocation4 [shape = 's32[2]{0}', space=sflag, size = 0x8, scoped, tag = 'scoped memory for tpu_custom_call.1']
    #allocation5 [shape = 'u8[32768]{0}', space=vmem, size = 0x8000, scoped, tag = 'input window, operand 1, single buffered']
    #allocation6 [shape = 's32[1]{0}', space=sflag, size = 0x4, scoped, tag = 'scoped memory for tpu_custom_call.1']
    #allocation7 [shape = 'u8[65536]{0}', space=vmem, size = 0x10000, scoped, tag = 'input window, operand 2, single buffered']
    #allocation8 [shape = 'u8[1048576]{0}', space=vmem, size = 0x100000, scoped, tag = 'output window, operand 0']
    %10 = vsyncpa [#allocation3], 0
    %s11 = scalar_lea.sflag [#allocation3], 1
    %12 = vsyncpa %s11, 0
    %13 = vsyncpa [#allocation6], 0
    %14 = vsyncpa [#allocation4], 0
    %s15 = scalar_lea.sflag [#allocation4], 1
    %16 = vsyncpa %s15, 0
    loop: start=0, step=1, limit=4
    $region2: #{tpu_custom_call.1} parent=1 // loop_pre_header
      _
    $region3: #{tpu_custom_call.1} parent=1 // loop_header
      %s18 = sphi 0, %s22
      %p19 = scmp.ge.s32.totalorder %s18, 4
      %s25 = sphi 0, %s37
      %s26 = sphi 0, %s33
      %s27 = sphi 0, %s25
      %s28 = sphi 0, %s26
      %s29 = sphi 0, %s27
      %s30 = sphi 0, %s28
      %s42 = sphi 0, %s44
      %s45 = sphi 0, %s42
      %s46 = sphi 0, %s45
      %s62 = sphi 0, %s46
      %s66 = sphi 0, %s66
      %s68 = sphi 0, %s66
      %s69 = sphi 0, %s68
      %s83 = sphi 0, %s69
      %s87 = sphi 0, %s87
      %s89 = sphi 0, %s87
      %s90 = sphi 0, %s89
      %s104 = sphi 0, %s90
      %s108 = sphi 0, %s108
      %s110 = sphi 0, %s108
      %s111 = sphi 0, %s110
      %s125 = sphi 0, %s111
      %s129 = sphi 0, %s129
      %s131 = sphi 0, %s129
      %s132 = sphi 0, %s131
      %s146 = sphi 0, %s132
      %s154 = sphi 0, %s156
      %s157 = sphi 0, %s154
      %s158 = sphi 0, %s157
      %s174 = sphi 0, %s158
    $region4: #{tpu_custom_call.1} parent=1 // loop_header_branch
      %21 = sbr.rel (%p19) target = $region8
    $region5: #{tpu_custom_call.1} parent=1 // loop_body
      %s23 = ssub.s32 %s18, 1
      %s24 = ssub.s32 %s18, 2
      %s31 = sadd.s32 1, %s26
      %p32 = scmp.ge.s32.totalorder %s31, 1
      %s33 = scalar_select %p32, 0, %s31
      %s34 = sadd.s32 1, %s25
      %s35 = scalar_select %p32, %s34, %s25
      %p36 = scmp.ge.s32.totalorder %s35, 2
      %s37 = scalar_select %p36, 0, %s35
      %s38 = ssub.s32 %s25, %s37
      %s39 = ssub.s32 %s26, %s33
      %s40 = sor.u32 %s38, %s39
      %p41 = scmp.eq.s32.totalorder %s40, 0
      %s43 = sadd.s32 %s42, 1
      %s44 = scalar_select %p41, %s42, %s43
      %p47 = pneg %p41
      %p48 = scmp.eq.s32.totalorder %s18, 1
      %p49 = por %p47, %p48
      %p50 = scmp.ne.s32.totalorder %s42, %s45
      %p51 = scmp.eq.s32.totalorder %s18, 0
      %p52 = por %p50, %p51
      %p53 = scmp.ne.s32.totalorder %s42, %s45
      %p54 = scmp.eq.s32.totalorder %s23, 1
      %p55 = por %p53, %p54
      %p56 = scmp.ne.s32.totalorder %s45, %s46
      %p57 = scmp.eq.s32.totalorder %s23, 0
      %p58 = por %p56, %p57
      %p59 = scmp.ne.s32.totalorder %s45, %s46
      %p60 = scmp.eq.s32.totalorder %s24, 1
      %p61 = por %p59, %p60
      %p63 = scmp.ne.s32.totalorder %s46, %s62
      %p64 = scmp.eq.s32.totalorder %s24, 0
      %p65 = por %p63, %p64
      %s67 = sadd.s32 %s66, 1
      %p70 = scmp.eq.s32.totalorder %s18, 1
      %p71 = scmp.ne.s32.totalorder %s66, %s68
      %p72 = scmp.eq.s32.totalorder %s18, 0
      %p73 = por %p71, %p72
      %p74 = scmp.ne.s32.totalorder %s66, %s68
      %p75 = scmp.eq.s32.totalorder %s23, 1
      %p76 = por %p74, %p75
      %p77 = scmp.ne.s32.totalorder %s68, %s69
      %p78 = scmp.eq.s32.totalorder %s23, 0
      %p79 = por %p77, %p78
      %p80 = scmp.ne.s32.totalorder %s68, %s69
      %p81 = scmp.eq.s32.totalorder %s24, 1
      %p82 = por %p80, %p81
      %p84 = scmp.ne.s32.totalorder %s69, %s83
      %p85 = scmp.eq.s32.totalorder %s24, 0
      %p86 = por %p84, %p85
      %s88 = sadd.s32 %s87, 1
      %p91 = scmp.eq.s32.totalorder %s18, 1
      %p92 = scmp.ne.s32.totalorder %s87, %s89
      %p93 = scmp.eq.s32.totalorder %s18, 0
      %p94 = por %p92, %p93
      %p95 = scmp.ne.s32.totalorder %s87, %s89
      %p96 = scmp.eq.s32.totalorder %s23, 1
      %p97 = por %p95, %p96
      %p98 = scmp.ne.s32.totalorder %s89, %s90
      %p99 = scmp.eq.s32.totalorder %s23, 0
      %p100 = por %p98, %p99
      %p101 = scmp.ne.s32.totalorder %s89, %s90
      %p102 = scmp.eq.s32.totalorder %s24, 1
      %p103 = por %p101, %p102
      %p105 = scmp.ne.s32.totalorder %s90, %s104
      %p106 = scmp.eq.s32.totalorder %s24, 0
      %p107 = por %p105, %p106
      %s109 = sadd.s32 %s108, 1
      %p112 = scmp.eq.s32.totalorder %s18, 1
      %p113 = scmp.ne.s32.totalorder %s108, %s110
      %p114 = scmp.eq.s32.totalorder %s18, 0
      %p115 = por %p113, %p114
      %p116 = scmp.ne.s32.totalorder %s108, %s110
      %p117 = scmp.eq.s32.totalorder %s23, 1
      %p118 = por %p116, %p117
      %p119 = scmp.ne.s32.totalorder %s110, %s111
      %p120 = scmp.eq.s32.totalorder %s23, 0
      %p121 = por %p119, %p120
      %p122 = scmp.ne.s32.totalorder %s110, %s111
      %p123 = scmp.eq.s32.totalorder %s24, 1
      %p124 = por %p122, %p123
      %p126 = scmp.ne.s32.totalorder %s111, %s125
      %p127 = scmp.eq.s32.totalorder %s24, 0
      %p128 = por %p126, %p127
      %s130 = sadd.s32 %s129, 1
      %p133 = scmp.eq.s32.totalorder %s18, 1
      %p134 = scmp.ne.s32.totalorder %s129, %s131
      %p135 = scmp.eq.s32.totalorder %s18, 0
      %p136 = por %p134, %p135
      %p137 = scmp.ne.s32.totalorder %s129, %s131
      %p138 = scmp.eq.s32.totalorder %s23, 1
      %p139 = por %p137, %p138
      %p140 = scmp.ne.s32.totalorder %s131, %s132
      %p141 = scmp.eq.s32.totalorder %s23, 0
      %p142 = por %p140, %p141
      %p143 = scmp.ne.s32.totalorder %s131, %s132
      %p144 = scmp.eq.s32.totalorder %s24, 1
      %p145 = por %p143, %p144
      %p147 = scmp.ne.s32.totalorder %s132, %s146
      %p148 = scmp.eq.s32.totalorder %s24, 0
      %p149 = por %p147, %p148
      %s150 = ssub.s32 %s25, %s37
      %s151 = ssub.s32 %s26, %s33
      %s152 = sor.u32 %s150, %s151
      %p153 = scmp.eq.s32.totalorder %s152, 0
      %s155 = sadd.s32 %s154, 1
      %s156 = scalar_select %p153, %s154, %s155
      %p159 = pneg %p153
      %p160 = scmp.eq.s32.totalorder %s18, 1
      %p161 = por %p159, %p160
      %p162 = scmp.ne.s32.totalorder %s154, %s157
      %p163 = scmp.eq.s32.totalorder %s18, 0
      %p164 = por %p162, %p163
      %p165 = scmp.ne.s32.totalorder %s154, %s157
      %p166 = scmp.eq.s32.totalorder %s23, 1
      %p167 = por %p165, %p166
      %p168 = scmp.ne.s32.totalorder %s157, %s158
      %p169 = scmp.eq.s32.totalorder %s23, 0
      %p170 = por %p168, %p169
      %p171 = scmp.ne.s32.totalorder %s157, %s158
      %p172 = scmp.eq.s32.totalorder %s24, 1
      %p173 = por %p171, %p172
      %p175 = scmp.ne.s32.totalorder %s158, %s174
      %p176 = scmp.eq.s32.totalorder %s24, 0
      %p177 = por %p175, %p176
      %p178 = scmp.le.s32.totalorder 1, %s18
      %p179 = scmp.lt.s32.totalorder %s18, 3
      %p180 = pnand %p178, %p179
      %p181 = pneg %p180
      // Predicated region
      $region9: #{tpu_custom_call.1} parent=5 // pred_check
        _
      $region10: #{tpu_custom_call.1} parent=5 // pred_check_branch
        %183 = sbr.rel (%p180) target = $region12
      $region11: #{tpu_custom_call.1} parent=5 // pred_region
        %s184 = ssub.s32 %s18, 1
        // Predicated region
        $region13: #{tpu_custom_call.1} parent=11 // pred_check
          %p185 = pneg %p79
        $region14: #{tpu_custom_call.1} parent=11 // pred_check_branch
          %187 = sbr.rel (%p185) target = $region16
        $region15: #{tpu_custom_call.1} parent=11 // pred_region
          %s189 = ssub.s32 1024, 1024
          %190 = vsyncadd [#allocation6], %s189
          %s191 = sshll.u32 [#allocation5], 4
          %s192 = int_to_ptr.vmem [resolvable:$true] %s191
          %197 = dma.hbm_to_vmem [thread:$0]  %s1, 1024, %s192, [#allocation6], 256, 256, 16
        $region16: #{tpu_custom_call.1} parent=11 // pred_fallthru
          _
        // Predicated region
        $region17: #{tpu_custom_call.1} parent=11 // pred_check
          %p198 = pneg %p100
        $region18: #{tpu_custom_call.1} parent=11 // pred_check_branch
          %200 = sbr.rel (%p198) target = $region20
        $region19: #{tpu_custom_call.1} parent=11 // pred_region
          %s202 = ssub.s32 2048, 2048
          %203 = vsyncadd [#allocation6], %s202
          %s204 = sshll.u32 [#allocation7], 4
          %s205 = int_to_ptr.vmem [resolvable:$true] %s204
          %210 = dma.hbm_to_vmem [thread:$0]  %s2, 2048, %s205, [#allocation6], 128, 128, 8
        $region20: #{tpu_custom_call.1} parent=11 // pred_fallthru
          _
        // Predicated region
        $region21: #{tpu_custom_call.1} parent=11 // pred_check
          %p211 = pneg %p121
        $region22: #{tpu_custom_call.1} parent=11 // pred_check_branch
          %213 = sbr.rel (%p211) target = $region24
        $region23: #{tpu_custom_call.1} parent=11 // pred_region
          _
        $region24: #{tpu_custom_call.1} parent=11 // pred_fallthru
          _
        // Predicated region
        $region25: #{tpu_custom_call.1} parent=11 // pred_check
          %p214 = pneg %p142
        $region26: #{tpu_custom_call.1} parent=11 // pred_check_branch
          %216 = sbr.rel (%p214) target = $region28
        $region27: #{tpu_custom_call.1} parent=11 // pred_region
          _
        $region28: #{tpu_custom_call.1} parent=11 // pred_fallthru
          _
      $region12: #{tpu_custom_call.1} parent=5 // pred_fallthru
        _
      %p217 = scmp.lt.s32.totalorder %s18, 2
      // Predicated region
      $region29: #{tpu_custom_call.1} parent=5 // pred_check
        %p218 = pneg %p217
      $region30: #{tpu_custom_call.1} parent=5 // pred_check_branch
        %220 = sbr.rel (%p218) target = $region32
      $region31: #{tpu_custom_call.1} parent=5 // pred_region
        // Predicated region
        $region33: #{tpu_custom_call.1} parent=31 // pred_check
          %p221 = pneg %p52
        $region34: #{tpu_custom_call.1} parent=31 // pred_check_branch
          %223 = sbr.rel (%p221) target = $region36
        $region35: #{tpu_custom_call.1} parent=31 // pred_region
          %s224 = sand.u32 %s42, 1
          %s225 = scalar_lea.sflag [#allocation3], %s224
          %s226 = sand.u32 %s42, 1
          %s227 = smul.addr %s226, 256
          %s228 = scalar_lea.vmem [#allocation2], %s227
          %s229 = smul.u32 16, %s26
          %s231 = ssub.s32 4096, 4096
          %232 = vsyncadd %s225, %s231
          %s233 = smul.addr %s229, 2
          %s234 = smul.addr %s25, 32
          %s235 = sadd.s32 %s233, %s234
          %s236 = smul.addr %s235, 128
          %s237 = scalar_lea.hbm %s0, %s236
          %s238 = sshll.u32 %s228, 4
          %s239 = int_to_ptr.vmem [resolvable:$true] %s238
          %244 = dma.hbm_to_vmem [thread:$0]  %s237, 4096, %s239, %s225, 128, 128, 8
        $region36: #{tpu_custom_call.1} parent=31 // pred_fallthru
          _
      $region32: #{tpu_custom_call.1} parent=5 // pred_fallthru
        _
      %p245 = scmp.le.s32.totalorder 1, %s18
      %p246 = scmp.lt.s32.totalorder %s18, 3
      %p247 = pnand %p245, %p246
      %p248 = pneg %p247
      // Predicated region
      $region37: #{tpu_custom_call.1} parent=5 // pred_check
        _
      $region38: #{tpu_custom_call.1} parent=5 // pred_check_branch
        %250 = sbr.rel (%p247) target = $region40
      $region39: #{tpu_custom_call.1} parent=5 // pred_region
        %s251 = ssub.s32 %s18, 1
        %s252 = sand.u32 %s45, 1
        %s253 = scalar_lea.sflag [#allocation3], %s252
        %s254 = sand.u32 %s45, 1
        %s255 = smul.addr %s254, 256
        %s256 = scalar_lea.vmem [#allocation2], %s255
        // Predicated region
        $region41: #{tpu_custom_call.1} parent=39 // pred_check
          %p257 = pneg %p58
        $region42: #{tpu_custom_call.1} parent=39 // pred_check_branch
          %259 = sbr.rel (%p257) target = $region44
        $region43: #{tpu_custom_call.1} parent=39 // pred_region
          %260 = dma.done %s253, 4096
        $region44: #{tpu_custom_call.1} parent=39 // pred_fallthru
          _
        // Predicated region
        $region45: #{tpu_custom_call.1} parent=39 // pred_check
          %p261 = pneg %p79
        $region46: #{tpu_custom_call.1} parent=39 // pred_check_branch
          %263 = sbr.rel (%p261) target = $region48
        $region47: #{tpu_custom_call.1} parent=39 // pred_region
          %264 = dma.done [#allocation6], 1024
        $region48: #{tpu_custom_call.1} parent=39 // pred_fallthru
          _
        // Predicated region
        $region49: #{tpu_custom_call.1} parent=39 // pred_check
          %p265 = pneg %p100
        $region50: #{tpu_custom_call.1} parent=39 // pred_check_branch
          %267 = sbr.rel (%p265) target = $region52
        $region51: #{tpu_custom_call.1} parent=39 // pred_region
          %268 = dma.done [#allocation6], 2048
        $region52: #{tpu_custom_call.1} parent=39 // pred_fallthru
          _
        %s269 = sand.u32 %s45, 1
        %s270 = scalar_lea.sflag [#allocation3], %s269
        %s271 = sand.u32 %s45, 1
        %s272 = smul.addr %s271, 256
        %s273 = scalar_lea.vmem [#allocation2], %s272
        %p274 = pneg %p58
        %p275 = pneg %p55
        %p276 = pneg %p79
        %p277 = pneg %p76
        %p278 = pneg %p100
        %p279 = pneg %p97
        %p280 = pneg %p121
        %p281 = pneg %p118
        %p282 = pneg %p142
        %p283 = pneg %p139
        %p284 = pneg %p170
        %p285 = pneg %p167
        %s286 = sand.u32 %s157, 1
        %s287 = scalar_lea.sflag [#allocation4], %s286
        %s288 = sand.u32 %s157, 1
        %s289 = smul.addr %s288, 1024
        %s290 = scalar_lea.vmem [#allocation8], %s289
        %s291 = smul.u32 16, %s28
        %s292 = smul.u32 16, %s28
        %v294 = vld [vmem:[%s256] sm:$0xff]
        %v295 = vld [vmem:[%s256 + $0x8] sm:$0xff]
        %v296 = vld [vmem:[%s256 + $0x10] sm:$0xff]
        %v297 = vld [vmem:[%s256 + $0x18] sm:$0xff]
        %v298 = vld [vmem:[%s256 + $0x20] sm:$0xff]
        %v299 = vld [vmem:[%s256 + $0x28] sm:$0xff]
        %v300 = vld [vmem:[%s256 + $0x30] sm:$0xff]
        %v301 = vld [vmem:[%s256 + $0x38] sm:$0xff]
        %v302 = vld [vmem:[%s256 + $0x40] sm:$0xff]
        %v303 = vld [vmem:[%s256 + $0x48] sm:$0xff]
        %v304 = vld [vmem:[%s256 + $0x50] sm:$0xff]
        %v305 = vld [vmem:[%s256 + $0x58] sm:$0xff]
        %v306 = vld [vmem:[%s256 + $0x60] sm:$0xff]
        %v307 = vld [vmem:[%s256 + $0x68] sm:$0xff]
        %v308 = vld [vmem:[%s256 + $0x70] sm:$0xff]
        %v309 = vld [vmem:[%s256 + $0x78] sm:$0xff]
        %v310 = vld [vmem:[%s256 + $0x80] sm:$0xff]
        %v311 = vld [vmem:[%s256 + $0x88] sm:$0xff]
        %v312 = vld [vmem:[%s256 + $0x90] sm:$0xff]
        %v313 = vld [vmem:[%s256 + $0x98] sm:$0xff]
        %v314 = vld [vmem:[%s256 + $0xa0] sm:$0xff]
        %v315 = vld [vmem:[%s256 + $0xa8] sm:$0xff]
        %v316 = vld [vmem:[%s256 + $0xb0] sm:$0xff]
        %v317 = vld [vmem:[%s256 + $0xb8] sm:$0xff]
        %v318 = vld [vmem:[%s256 + $0xc0] sm:$0xff]
        %v319 = vld [vmem:[%s256 + $0xc8] sm:$0xff]
        %v320 = vld [vmem:[%s256 + $0xd0] sm:$0xff]
        %v321 = vld [vmem:[%s256 + $0xd8] sm:$0xff]
        %v322 = vld [vmem:[%s256 + $0xe0] sm:$0xff]
        %v323 = vld [vmem:[%s256 + $0xe8] sm:$0xff]
        %v324 = vld [vmem:[%s256 + $0xf0] sm:$0xff]
        %v325 = vld [vmem:[%s256 + $0xf8] sm:$0xff]
        %v326 = vpack.c.bf16 %v295, %v294
        %v327 = vpack.c.bf16 %v297, %v296
        %v328 = vpack.c.bf16 %v299, %v298
        %v329 = vpack.c.bf16 %v301, %v300
        %v330 = vpack.c.bf16 %v303, %v302
        %v331 = vpack.c.bf16 %v305, %v304
        %v332 = vpack.c.bf16 %v307, %v306
        %v333 = vpack.c.bf16 %v309, %v308
        %v334 = vpack.c.bf16 %v311, %v310
        %v335 = vpack.c.bf16 %v313, %v312
        %v336 = vpack.c.bf16 %v315, %v314
        %v337 = vpack.c.bf16 %v317, %v316
        %v338 = vpack.c.bf16 %v319, %v318
        %v339 = vpack.c.bf16 %v321, %v320
        %v340 = vpack.c.bf16 %v323, %v322
        %v341 = vpack.c.bf16 %v325, %v324
        %v342 = vld [vmem:[#allocation5] sm:$0xff]
        %v343 = vld [vmem:[#allocation5 + $0x8] sm:$0xff]
        %v344 = vld [vmem:[#allocation5 + $0x10] sm:$0xff]
        %v345 = vld [vmem:[#allocation5 + $0x18] sm:$0xff]
        %v346 = vld [vmem:[#allocation5 + $0x20] sm:$0xff]
        %v347 = vld [vmem:[#allocation5 + $0x28] sm:$0xff]
        %v348 = vld [vmem:[#allocation5 + $0x30] sm:$0xff]
        %v349 = vld [vmem:[#allocation5 + $0x38] sm:$0xff]
        %v358 = vunpack.c.l.b16 %v342
        %v359 = vunpack.c.h.b16 %v342
        %v360 = vunpack.c.l.b16 %v343
        %v361 = vunpack.c.h.b16 %v343
        %v362 = vunpack.c.l.b16 %v344
        %v363 = vunpack.c.h.b16 %v344
        %v364 = vunpack.c.l.b16 %v345
        %v365 = vunpack.c.h.b16 %v345
        %v366 = vunpack.c.l.b16 %v346
        %v367 = vunpack.c.h.b16 %v346
        %v368 = vunpack.c.l.b16 %v347
        %v369 = vunpack.c.h.b16 %v347
        %v370 = vunpack.c.l.b16 %v348
        %v371 = vunpack.c.h.b16 %v348
        %v372 = vunpack.c.l.b16 %v349
        %v373 = vunpack.c.h.b16 %v349
        %v374 = vpack.c.b16 %v362, %v358
        %v375 = vpack.c.b16 %v363, %v359
        %v376 = vpack.c.b16 %v364, %v360
        %v377 = vpack.c.b16 %v365, %v361
        %v378 = vpack.c.b16 %v370, %v366
        %v379 = vpack.c.b16 %v371, %v367
        %v380 = vpack.c.b16 %v372, %v368
        %v381 = vpack.c.b16 %v373, %v369
        %vm390 = vcmask 261120
        %v392 = vsel %vm390, %v326, 0
        %v395 = vsel %vm390, %v327, 0
        %v398 = vsel %vm390, %v328, 0
        %v401 = vsel %vm390, %v329, 0
        %v404 = vsel %vm390, %v330, 0
        %v407 = vsel %vm390, %v331, 0
        %v410 = vsel %vm390, %v332, 0
        %v413 = vsel %vm390, %v333, 0
        %v416 = vsel %vm390, %v334, 0
        %v419 = vsel %vm390, %v335, 0
        %v422 = vsel %vm390, %v336, 0
        %v425 = vsel %vm390, %v337, 0
        %v428 = vsel %vm390, %v338, 0
        %v431 = vsel %vm390, %v339, 0
        %v434 = vsel %vm390, %v340, 0
        %v437 = vsel %vm390, %v341, 0
        %439 = vmatprep.subr.bf16.mxu0 %v375
        %440 = vmatpush1.bf16.msra.mxu0 %v374
        %441 = vmatprep.subr.bf16.mxu0 %v379
        %442 = vmatpush1.bf16.msra.mxu0 %v378
        %443 = vmatprep.subr.bf16.mxu0 0
        %444 = vmatpush1.bf16.msra.mxu0 0
        %445 = vmatprep.subr.bf16.mxu0 0
        %446 = vmatpush1.bf16.msra.mxu0 0
        %447 = vmatprep.subr.bf16.mxu0 0
        %448 = vmatpush1.bf16.msra.mxu0 0
        %449 = vmatprep.subr.bf16.mxu0 0
        %450 = vmatpush1.bf16.msra.mxu0 0
        %451 = vmatprep.subr.bf16.mxu0 0
        %452 = vmatpush1.bf16.msra.mxu0 0
        %453 = vmatprep.subr.bf16.mxu0 0
        %454 = vmatpush1.bf16.msra.mxu0 0
        %455 = vmatprep.subr.bf16.mxu0 0
        %456 = vmatpush1.bf16.msra.mxu0 0
        %457 = vmatprep.subr.bf16.mxu0 0
        %458 = vmatpush1.bf16.msra.mxu0 0
        %459 = vmatprep.subr.bf16.mxu0 0
        %460 = vmatpush1.bf16.msra.mxu0 0
        %461 = vmatprep.subr.bf16.mxu0 0
        %462 = vmatpush1.bf16.msra.mxu0 0
        %463 = vmatprep.subr.bf16.mxu0 0
        %464 = vmatpush1.bf16.msra.mxu0 0
        %465 = vmatprep.subr.bf16.mxu0 0
        %466 = vmatpush1.bf16.msra.mxu0 0
        %467 = vmatprep.subr.bf16.mxu0 0
        %468 = vmatpush1.bf16.msra.mxu0 0
        %469 = vmatprep.subr.bf16.mxu0 0
        %470 = vmatpush1.bf16.msra.mxu0 0
        %471 = vmatprep.mubr.bf16.mxu0 0
        %472 = vmatmul.mubr.bf16.gmra.mrb[0].mxu0 %v392
        %v473 = vpop.f32.mrb[0].mxu0
        %v474 = vadd.f32 0.0, %v473
        %v475 = vpop.f32.mrb[0].mxu0
        %v476 = vadd.f32 0.0, %v475
        %v477 = vpop.f32.mrb[0].mxu0
        %v478 = vadd.f32 0.0, %v477
        %v479 = vpop.f32.mrb[0].mxu0
        %v480 = vadd.f32 0.0, %v479
        %481 = vmatprep.mubr.bf16.mxu0 0
        %482 = vmatmul.mubr.bf16.gmra.mrb[0].mxu0 %v395
        %v483 = vpop.f32.mrb[0].mxu0
        %v484 = vadd.f32 0.0, %v483
        %v485 = vpop.f32.mrb[0].mxu0
        %v486 = vadd.f32 0.0, %v485
        %v487 = vpop.f32.mrb[0].mxu0
        %v488 = vadd.f32 0.0, %v487
        %v489 = vpop.f32.mrb[0].mxu0
        %v490 = vadd.f32 0.0, %v489
        %491 = vmatprep.mubr.bf16.mxu0 0
        %492 = vmatmul.mubr.bf16.gmra.mrb[0].mxu0 %v398
        %v493 = vpop.f32.mrb[0].mxu0
        %v494 = vadd.f32 0.0, %v493
        %v495 = vpop.f32.mrb[0].mxu0
        %v496 = vadd.f32 0.0, %v495
        %v497 = vpop.f32.mrb[0].mxu0
        %v498 = vadd.f32 0.0, %v497
        %v499 = vpop.f32.mrb[0].mxu0
        %v500 = vadd.f32 0.0, %v499
        %501 = vmatprep.mubr.bf16.mxu0 0
        %502 = vmatmul.mubr.bf16.gmra.mrb[0].mxu0 %v401
        %v503 = vpop.f32.mrb[0].mxu0
        %v504 = vadd.f32 0.0, %v503
        %v505 = vpop.f32.mrb[0].mxu0
        %v506 = vadd.f32 0.0, %v505
        %v507 = vpop.f32.mrb[0].mxu0
        %v508 = vadd.f32 0.0, %v507
        %v509 = vpop.f32.mrb[0].mxu0
        %v510 = vadd.f32 0.0, %v509
        %511 = vmatprep.mubr.bf16.mxu0 0
        %512 = vmatmul.mubr.bf16.gmra.mrb[0].mxu0 %v404
        %v513 = vpop.f32.mrb[0].mxu0
        %v514 = vadd.f32 0.0, %v513
        %v515 = vpop.f32.mrb[0].mxu0
        %v516 = vadd.f32 0.0, %v515
        %v517 = vpop.f32.mrb[0].mxu0
        %v518 = vadd.f32 0.0, %v517
        %v519 = vpop.f32.mrb[0].mxu0
        %v520 = vadd.f32 0.0, %v519
        %521 = vmatprep.mubr.bf16.mxu0 0
        %522 = vmatmul.mubr.bf16.gmra.mrb[0].mxu0 %v407
        %v523 = vpop.f32.mrb[0].mxu0
        %v524 = vadd.f32 0.0, %v523
        %v525 = vpop.f32.mrb[0].mxu0
        %v526 = vadd.f32 0.0, %v525
        %v527 = vpop.f32.mrb[0].mxu0
        %v528 = vadd.f32 0.0, %v527
        %v529 = vpop.f32.mrb[0].mxu0
        %v530 = vadd.f32 0.0, %v529
        %531 = vmatprep.mubr.bf16.mxu0 0
        %532 = vmatmul.mubr.bf16.gmra.mrb[0].mxu0 %v410
        %v533 = vpop.f32.mrb[0].mxu0
        %v534 = vadd.f32 0.0, %v533
        %v535 = vpop.f32.mrb[0].mxu0
        %v536 = vadd.f32 0.0, %v535
        %v537 = vpop.f32.mrb[0].mxu0
        %v538 = vadd.f32 0.0, %v537
        %v539 = vpop.f32.mrb[0].mxu0
        %v540 = vadd.f32 0.0, %v539
        %541 = vmatprep.mubr.bf16.mxu0 0
        %542 = vmatmul.mubr.bf16.gmra.mrb[0].mxu0 %v413
        %v543 = vpop.f32.mrb[0].mxu0
        %v544 = vadd.f32 0.0, %v543
        %v545 = vpop.f32.mrb[0].mxu0
        %v546 = vadd.f32 0.0, %v545
        %v547 = vpop.f32.mrb[0].mxu0
        %v548 = vadd.f32 0.0, %v547
        %v549 = vpop.f32.mrb[0].mxu0
        %v550 = vadd.f32 0.0, %v549
        %551 = vmatprep.mubr.bf16.mxu0 0
        %552 = vmatmul.mubr.bf16.gmra.mrb[0].mxu0 %v416
        %v553 = vpop.f32.mrb[0].mxu0
        %v554 = vadd.f32 0.0, %v553
        %v555 = vpop.f32.mrb[0].mxu0
        %v556 = vadd.f32 0.0, %v555
        %v557 = vpop.f32.mrb[0].mxu0
        %v558 = vadd.f32 0.0, %v557
        %v559 = vpop.f32.mrb[0].mxu0
        %v560 = vadd.f32 0.0, %v559
        %561 = vmatprep.mubr.bf16.mxu0 0
        %562 = vmatmul.mubr.bf16.gmra.mrb[0].mxu0 %v419
        %v563 = vpop.f32.mrb[0].mxu0
        %v564 = vadd.f32 0.0, %v563
        %v565 = vpop.f32.mrb[0].mxu0
        %v566 = vadd.f32 0.0, %v565
        %v567 = vpop.f32.mrb[0].mxu0
        %v568 = vadd.f32 0.0, %v567
        %v569 = vpop.f32.mrb[0].mxu0
        %v570 = vadd.f32 0.0, %v569
        %571 = vmatprep.mubr.bf16.mxu0 0
        %572 = vmatmul.mubr.bf16.gmra.mrb[0].mxu0 %v422
        %v573 = vpop.f32.mrb[0].mxu0
        %v574 = vadd.f32 0.0, %v573
        %v575 = vpop.f32.mrb[0].mxu0
        %v576 = vadd.f32 0.0, %v575
        %v577 = vpop.f32.mrb[0].mxu0
        %v578 = vadd.f32 0.0, %v577
        %v579 = vpop.f32.mrb[0].mxu0
        %v580 = vadd.f32 0.0, %v579
        %581 = vmatprep.mubr.bf16.mxu0 0
        %582 = vmatmul.mubr.bf16.gmra.mrb[0].mxu0 %v425
        %v583 = vpop.f32.mrb[0].mxu0
        %v584 = vadd.f32 0.0, %v583
        %v585 = vpop.f32.mrb[0].mxu0
        %v586 = vadd.f32 0.0, %v585
        %v587 = vpop.f32.mrb[0].mxu0
        %v588 = vadd.f32 0.0, %v587
        %v589 = vpop.f32.mrb[0].mxu0
        %v590 = vadd.f32 0.0, %v589
        %591 = vmatprep.mubr.bf16.mxu0 0
        %592 = vmatmul.mubr.bf16.gmra.mrb[0].mxu0 %v428
        %v593 = vpop.f32.mrb[0].mxu0
        %v594 = vadd.f32 0.0, %v593
        %v595 = vpop.f32.mrb[0].mxu0
        %v596 = vadd.f32 0.0, %v595
        %v597 = vpop.f32.mrb[0].mxu0
        %v598 = vadd.f32 0.0, %v597
        %v599 = vpop.f32.mrb[0].mxu0
        %v600 = vadd.f32 0.0, %v599
        %601 = vmatprep.mubr.bf16.mxu0 0
        %602 = vmatmul.mubr.bf16.gmra.mrb[0].mxu0 %v431
        %v603 = vpop.f32.mrb[0].mxu0
        %v604 = vadd.f32 0.0, %v603
        %v605 = vpop.f32.mrb[0].mxu0
        %v606 = vadd.f32 0.0, %v605
        %v607 = vpop.f32.mrb[0].mxu0
        %v608 = vadd.f32 0.0, %v607
        %v609 = vpop.f32.mrb[0].mxu0
        %v610 = vadd.f32 0.0, %v609
        %611 = vmatprep.mubr.bf16.mxu0 0
        %612 = vmatmul.mubr.bf16.gmra.mrb[0].mxu0 %v434
        %v613 = vpop.f32.mrb[0].mxu0
        %v614 = vadd.f32 0.0, %v613
        %v615 = vpop.f32.mrb[0].mxu0
        %v616 = vadd.f32 0.0, %v615
        %v617 = vpop.f32.mrb[0].mxu0
        %v618 = vadd.f32 0.0, %v617
        %v619 = vpop.f32.mrb[0].mxu0
        %v620 = vadd.f32 0.0, %v619
        %621 = vmatprep.mubr.bf16.mxu0 0
        %622 = vmatmul.mubr.bf16.gmra.mrb[0].mxu0 %v437
        %v623 = vpop.f32.mrb[0].mxu0
        %v624 = vadd.f32 0.0, %v623
        %v625 = vpop.f32.mrb[0].mxu0
        %v626 = vadd.f32 0.0, %v625
        %v627 = vpop.f32.mrb[0].mxu0
        %v628 = vadd.f32 0.0, %v627
        %v629 = vpop.f32.mrb[0].mxu0
        %v630 = vadd.f32 0.0, %v629
        %631 = vdwg.mxu0
        %632 = vmatprep.subr.bf16.mxu0 %v377
        %633 = vmatpush1.bf16.msra.mxu0 %v376
        %634 = vmatprep.subr.bf16.mxu0 %v381
        %635 = vmatpush1.bf16.msra.mxu0 %v380
        %636 = vmatprep.subr.bf16.mxu0 0
        %637 = vmatpush1.bf16.msra.mxu0 0
        %638 = vmatprep.subr.bf16.mxu0 0
        %639 = vmatpush1.bf16.msra.mxu0 0
        %640 = vmatprep.subr.bf16.mxu0 0
        %641 = vmatpush1.bf16.msra.mxu0 0
        %642 = vmatprep.subr.bf16.mxu0 0
        %643 = vmatpush1.bf16.msra.mxu0 0
        %644 = vmatprep.subr.bf16.mxu0 0
        %645 = vmatpush1.bf16.msra.mxu0 0
        %646 = vmatprep.subr.bf16.mxu0 0
        %647 = vmatpush1.bf16.msra.mxu0 0
        %648 = vmatprep.subr.bf16.mxu0 0
        %649 = vmatpush1.bf16.msra.mxu0 0
        %650 = vmatprep.subr.bf16.mxu0 0
        %651 = vmatpush1.bf16.msra.mxu0 0
        %652 = vmatprep.subr.bf16.mxu0 0
        %653 = vmatpush1.bf16.msra.mxu0 0
        %654 = vmatprep.subr.bf16.mxu0 0
        %655 = vmatpush1.bf16.msra.mxu0 0
        %656 = vmatprep.subr.bf16.mxu0 0
        %657 = vmatpush1.bf16.msra.mxu0 0
        %658 = vmatprep.subr.bf16.mxu0 0
        %659 = vmatpush1.bf16.msra.mxu0 0
        %660 = vmatprep.subr.bf16.mxu0 0
        %661 = vmatpush1.bf16.msra.mxu0 0
        %662 = vmatprep.subr.bf16.mxu0 0
        %663 = vmatpush1.bf16.msra.mxu0 0
        %664 = vmatprep.mubr.bf16.mxu0 0
        %665 = vmatmul.mubr.bf16.gmra.mrb[0].mxu0 %v392
        %v666 = vpop.f32.mrb[0].mxu0
        %v667 = vadd.f32 0.0, %v666
        %v668 = vpop.f32.mrb[0].mxu0
        %v669 = vadd.f32 0.0, %v668
        %v670 = vpop.f32.mrb[0].mxu0
        %v671 = vadd.f32 0.0, %v670
        %v672 = vpop.f32.mrb[0].mxu0
        %v673 = vadd.f32 0.0, %v672
        %674 = vmatprep.mubr.bf16.mxu0 0
        %675 = vmatmul.mubr.bf16.gmra.mrb[0].mxu0 %v395
        %v676 = vpop.f32.mrb[0].mxu0
        %v677 = vadd.f32 0.0, %v676
        %v678 = vpop.f32.mrb[0].mxu0
        %v679 = vadd.f32 0.0, %v678
        %v680 = vpop.f32.mrb[0].mxu0
        %v681 = vadd.f32 0.0, %v680
        %v682 = vpop.f32.mrb[0].mxu0
        %v683 = vadd.f32 0.0, %v682
        %684 = vmatprep.mubr.bf16.mxu0 0
        %685 = vmatmul.mubr.bf16.gmra.mrb[0].mxu0 %v398
        %v686 = vpop.f32.mrb[0].mxu0
        %v687 = vadd.f32 0.0, %v686
        %v688 = vpop.f32.mrb[0].mxu0
        %v689 = vadd.f32 0.0, %v688
        %v690 = vpop.f32.mrb[0].mxu0
        %v691 = vadd.f32 0.0, %v690
        %v692 = vpop.f32.mrb[0].mxu0
        %v693 = vadd.f32 0.0, %v692
        %694 = vmatprep.mubr.bf16.mxu0 0
        %695 = vmatmul.mubr.bf16.gmra.mrb[0].mxu0 %v401
        %v696 = vpop.f32.mrb[0].mxu0
        %v697 = vadd.f32 0.0, %v696
        %v698 = vpop.f32.mrb[0].mxu0
        %v699 = vadd.f32 0.0, %v698
        %v700 = vpop.f32.mrb[0].mxu0
        %v701 = vadd.f32 0.0, %v700
        %v702 = vpop.f32.mrb[0].mxu0
        %v703 = vadd.f32 0.0, %v702
        %704 = vmatprep.mubr.bf16.mxu0 0
        %705 = vmatmul.mubr.bf16.gmra.mrb[0].mxu0 %v404
        %v706 = vpop.f32.mrb[0].mxu0
        %v707 = vadd.f32 0.0, %v706
        %v708 = vpop.f32.mrb[0].mxu0
        %v709 = vadd.f32 0.0, %v708
        %v710 = vpop.f32.mrb[0].mxu0
        %v711 = vadd.f32 0.0, %v710
        %v712 = vpop.f32.mrb[0].mxu0
        %v713 = vadd.f32 0.0, %v712
        %714 = vmatprep.mubr.bf16.mxu0 0
        %715 = vmatmul.mubr.bf16.gmra.mrb[0].mxu0 %v407
        %v716 = vpop.f32.mrb[0].mxu0
        %v717 = vadd.f32 0.0, %v716
        %v718 = vpop.f32.mrb[0].mxu0
        %v719 = vadd.f32 0.0, %v718
        %v720 = vpop.f32.mrb[0].mxu0
        %v721 = vadd.f32 0.0, %v720
        %v722 = vpop.f32.mrb[0].mxu0
        %v723 = vadd.f32 0.0, %v722
        %724 = vmatprep.mubr.bf16.mxu0 0
        %725 = vmatmul.mubr.bf16.gmra.mrb[0].mxu0 %v410
        %v726 = vpop.f32.mrb[0].mxu0
        %v727 = vadd.f32 0.0, %v726
        %v728 = vpop.f32.mrb[0].mxu0
        %v729 = vadd.f32 0.0, %v728
        %v730 = vpop.f32.mrb[0].mxu0
        %v731 = vadd.f32 0.0, %v730
        %v732 = vpop.f32.mrb[0].mxu0
        %v733 = vadd.f32 0.0, %v732
        %734 = vmatprep.mubr.bf16.mxu0 0
        %735 = vmatmul.mubr.bf16.gmra.mrb[0].mxu0 %v413
        %v736 = vpop.f32.mrb[0].mxu0
        %v737 = vadd.f32 0.0, %v736
        %v738 = vpop.f32.mrb[0].mxu0
        %v739 = vadd.f32 0.0, %v738
        %v740 = vpop.f32.mrb[0].mxu0
        %v741 = vadd.f32 0.0, %v740
        %v742 = vpop.f32.mrb[0].mxu0
        %v743 = vadd.f32 0.0, %v742
        %744 = vmatprep.mubr.bf16.mxu0 0
        %745 = vmatmul.mubr.bf16.gmra.mrb[0].mxu0 %v416
        %v746 = vpop.f32.mrb[0].mxu0
        %v747 = vadd.f32 0.0, %v746
        %v748 = vpop.f32.mrb[0].mxu0
        %v749 = vadd.f32 0.0, %v748
        %v750 = vpop.f32.mrb[0].mxu0
        %v751 = vadd.f32 0.0, %v750
        %v752 = vpop.f32.mrb[0].mxu0
        %v753 = vadd.f32 0.0, %v752
        %754 = vmatprep.mubr.bf16.mxu0 0
        %755 = vmatmul.mubr.bf16.gmra.mrb[0].mxu0 %v419
        %v756 = vpop.f32.mrb[0].mxu0
        %v757 = vadd.f32 0.0, %v756
        %v758 = vpop.f32.mrb[0].mxu0
        %v759 = vadd.f32 0.0, %v758
        %v760 = vpop.f32.mrb[0].mxu0
        %v761 = vadd.f32 0.0, %v760
        %v762 = vpop.f32.mrb[0].mxu0
        %v763 = vadd.f32 0.0, %v762
        %764 = vmatprep.mubr.bf16.mxu0 0
        %765 = vmatmul.mubr.bf16.gmra.mrb[0].mxu0 %v422
        %v766 = vpop.f32.mrb[0].mxu0
        %v767 = vadd.f32 0.0, %v766
        %v768 = vpop.f32.mrb[0].mxu0
        %v769 = vadd.f32 0.0, %v768
        %v770 = vpop.f32.mrb[0].mxu0
        %v771 = vadd.f32 0.0, %v770
        %v772 = vpop.f32.mrb[0].mxu0
        %v773 = vadd.f32 0.0, %v772
        %774 = vmatprep.mubr.bf16.mxu0 0
        %775 = vmatmul.mubr.bf16.gmra.mrb[0].mxu0 %v425
        %v776 = vpop.f32.mrb[0].mxu0
        %v777 = vadd.f32 0.0, %v776
        %v778 = vpop.f32.mrb[0].mxu0
        %v779 = vadd.f32 0.0, %v778
        %v780 = vpop.f32.mrb[0].mxu0
        %v781 = vadd.f32 0.0, %v780
        %v782 = vpop.f32.mrb[0].mxu0
        %v783 = vadd.f32 0.0, %v782
        %784 = vmatprep.mubr.bf16.mxu0 0
        %785 = vmatmul.mubr.bf16.gmra.mrb[0].mxu0 %v428
        %v786 = vpop.f32.mrb[0].mxu0
        %v787 = vadd.f32 0.0, %v786
        %v788 = vpop.f32.mrb[0].mxu0
        %v789 = vadd.f32 0.0, %v788
        %v790 = vpop.f32.mrb[0].mxu0
        %v791 = vadd.f32 0.0, %v790
        %v792 = vpop.f32.mrb[0].mxu0
        %v793 = vadd.f32 0.0, %v792
        %794 = vmatprep.mubr.bf16.mxu0 0
        %795 = vmatmul.mubr.bf16.gmra.mrb[0].mxu0 %v431
        %v796 = vpop.f32.mrb[0].mxu0
        %v797 = vadd.f32 0.0, %v796
        %v798 = vpop.f32.mrb[0].mxu0
        %v799 = vadd.f32 0.0, %v798
        %v800 = vpop.f32.mrb[0].mxu0
        %v801 = vadd.f32 0.0, %v800
        %v802 = vpop.f32.mrb[0].mxu0
        %v803 = vadd.f32 0.0, %v802
        %804 = vmatprep.mubr.bf16.mxu0 0
        %805 = vmatmul.mubr.bf16.gmra.mrb[0].mxu0 %v434
        %v806 = vpop.f32.mrb[0].mxu0
        %v807 = vadd.f32 0.0, %v806
        %v808 = vpop.f32.mrb[0].mxu0
        %v809 = vadd.f32 0.0, %v808
        %v810 = vpop.f32.mrb[0].mxu0
        %v811 = vadd.f32 0.0, %v810
        %v812 = vpop.f32.mrb[0].mxu0
        %v813 = vadd.f32 0.0, %v812
        %814 = vmatprep.mubr.bf16.mxu0 0
        %815 = vmatmul.mubr.bf16.gmra.mrb[0].mxu0 %v437
        %v816 = vpop.f32.mrb[0].mxu0
        %v817 = vadd.f32 0.0, %v816
        %v818 = vpop.f32.mrb[0].mxu0
        %v819 = vadd.f32 0.0, %v818
        %v820 = vpop.f32.mrb[0].mxu0
        %v821 = vadd.f32 0.0, %v820
        %v822 = vpop.f32.mrb[0].mxu0
        %v823 = vadd.f32 0.0, %v822
        %824 = vdwg.mxu0
        %v825 = vld [vmem:[%s3] sm:$0x1]
        %v826 = vld [vmem:[%s4] sm:$0x1]
        %v827 = vld [vmem:[#allocation7] sm:$0xff]
        %v828 = vld [vmem:[#allocation7 + $0x8] sm:$0xff]
        %v829 = vld [vmem:[#allocation7 + $0x10] sm:$0xff]
        %v830 = vld [vmem:[#allocation7 + $0x18] sm:$0xff]
        %v831 = vld [vmem:[#allocation7 + $0x20] sm:$0xff]
        %v832 = vld [vmem:[#allocation7 + $0x28] sm:$0xff]
        %v833 = vld [vmem:[#allocation7 + $0x30] sm:$0xff]
        %v834 = vld [vmem:[#allocation7 + $0x38] sm:$0xff]
        %v835 = vld [vmem:[#allocation7 + $0x40] sm:$0xff]
        %v836 = vld [vmem:[#allocation7 + $0x48] sm:$0xff]
        %v837 = vld [vmem:[#allocation7 + $0x50] sm:$0xff]
        %v838 = vld [vmem:[#allocation7 + $0x58] sm:$0xff]
        %v839 = vld [vmem:[#allocation7 + $0x60] sm:$0xff]
        %v840 = vld [vmem:[#allocation7 + $0x68] sm:$0xff]
        %v841 = vld [vmem:[#allocation7 + $0x70] sm:$0xff]
        %v842 = vld [vmem:[#allocation7 + $0x78] sm:$0xff]
        %v843 = vmul.f32 %v474, %v474
        %v844 = vmul.f32 %v478, %v478
        %v845 = vmul.f32 %v484, %v484
        %v846 = vmul.f32 %v488, %v488
        %v847 = vmul.f32 %v494, %v494
        %v848 = vmul.f32 %v498, %v498
        %v849 = vmul.f32 %v504, %v504
        %v850 = vmul.f32 %v508, %v508
        %v851 = vmul.f32 %v514, %v514
        %v852 = vmul.f32 %v518, %v518
        %v853 = vmul.f32 %v524, %v524
        %v854 = vmul.f32 %v528, %v528
        %v855 = vmul.f32 %v534, %v534
        %v856 = vmul.f32 %v538, %v538
        %v857 = vmul.f32 %v544, %v544
        %v858 = vmul.f32 %v548, %v548
        %v859 = vmul.f32 %v554, %v554
        %v860 = vmul.f32 %v558, %v558
        %v861 = vmul.f32 %v564, %v564
        %v862 = vmul.f32 %v568, %v568
        %v863 = vmul.f32 %v574, %v574
        %v864 = vmul.f32 %v578, %v578
        %v865 = vmul.f32 %v584, %v584
        %v866 = vmul.f32 %v588, %v588
        %v867 = vmul.f32 %v594, %v594
        %v868 = vmul.f32 %v598, %v598
        %v869 = vmul.f32 %v604, %v604
        %v870 = vmul.f32 %v608, %v608
        %v871 = vmul.f32 %v614, %v614
        %v872 = vmul.f32 %v618, %v618
        %v873 = vmul.f32 %v624, %v624
        %v874 = vmul.f32 %v628, %v628
        %875 = vmatprep.subr.mxu0 0.0
        %876 = vmatpush1.msra.mxu0 %v827
        %877 = vmatprep.subr.mxu0 0.0
        %878 = vmatpush1.msra.mxu0 %v828
        %879 = vmatprep.subr.mxu0 0.0
        %880 = vmatpush1.msra.mxu0 %v829
        %881 = vmatprep.subr.mxu0 0.0
        %882 = vmatpush1.msra.mxu0 %v830
        %883 = vmatprep.subr.mxu0 0.0
        %884 = vmatpush1.msra.mxu0 %v831
        %885 = vmatprep.subr.mxu0 0.0
        %886 = vmatpush1.msra.mxu0 %v832
        %887 = vmatprep.subr.mxu0 0.0
        %888 = vmatpush1.msra.mxu0 %v833
        %889 = vmatprep.subr.mxu0 0.0
        %890 = vmatpush1.msra.mxu0 %v834
        %891 = vmatprep.subr.mxu0 0.0
        %892 = vmatpush1.msra.mxu0 %v835
        %893 = vmatprep.subr.mxu0 0.0
        %894 = vmatpush1.msra.mxu0 %v836
        %895 = vmatprep.subr.mxu0 0.0
        %896 = vmatpush1.msra.mxu0 %v837
        %897 = vmatprep.subr.mxu0 0.0
        %898 = vmatpush1.msra.mxu0 %v838
        %899 = vmatprep.subr.mxu0 0.0
        %900 = vmatpush1.msra.mxu0 %v839
        %901 = vmatprep.subr.mxu0 0.0
        %902 = vmatpush1.msra.mxu0 %v840
        %903 = vmatprep.subr.mxu0 0.0
        %904 = vmatpush1.msra.mxu0 %v841
        %905 = vmatprep.subr.mxu0 0.0
        %906 = vmatpush1.msra.mxu0 %v842
        %907 = vmatprep.subr.mxu0 0.0
        %908 = vmatpush1.msra.mxu0 0.0
        %909 = vmatprep.subr.mxu0 0.0
        %910 = vmatpush1.msra.mxu0 0.0
        %911 = vmatprep.subr.mxu0 0.0
        %912 = vmatpush1.msra.mxu0 0.0
        %913 = vmatprep.subr.mxu0 0.0
        %914 = vmatpush1.msra.mxu0 0.0
        %915 = vmatprep.subr.mxu0 0.0
        %916 = vmatpush1.msra.mxu0 0.0
        %917 = vmatprep.subr.mxu0 0.0
        %918 = vmatpush1.msra.mxu0 0.0
        %919 = vmatprep.subr.mxu0 0.0
        %920 = vmatpush1.msra.mxu0 0.0
        %921 = vmatprep.subr.mxu0 0.0
        %922 = vmatpush1.msra.mxu0 0.0
        %923 = vmatprep.subr.mxu0 0.0
        %924 = vmatpush1.msra.mxu0 0.0
        %925 = vmatprep.subr.mxu0 0.0
        %926 = vmatpush1.msra.mxu0 0.0
        %927 = vmatprep.subr.mxu0 0.0
        %928 = vmatpush1.msra.mxu0 0.0
        %929 = vmatprep.subr.mxu0 0.0
        %930 = vmatpush1.msra.mxu0 0.0
        %931 = vmatprep.subr.mxu0 0.0
        %932 = vmatpush1.msra.mxu0 0.0
        %933 = vmatprep.subr.mxu0 0.0
        %934 = vmatpush1.msra.mxu0 0.0
        %935 = vmatprep.subr.mxu0 0.0
        %936 = vmatpush1.msra.mxu0 0.0
        %937 = vmatprep.subr.mxu0 0.0
        %938 = vmatpush1.msra.mxu0 0.0
        %939 = vmatprep.mubr.f32.mxu0 0.0
        %940 = vmatmul.mubr.f32.gmra.mrb[0].mxu0 %v843
        %v941 = vpop.f32.mrb[0].mxu0
        %v942 = vadd.f32 1e-05, %v941
        %v943 = vpop.f32.mrb[0].mxu0
        %944 = vmatprep.mubr.f32.mxu0 0.0
        %945 = vmatmul.mubr.f32.gmra.mrb[0].mxu0 %v844
        %v946 = vpop.f32.mrb[0].mxu0
        %v947 = vadd.f32 1e-05, %v946
        %v948 = vpop.f32.mrb[0].mxu0
        %949 = vmatprep.mubr.f32.mxu0 0.0
        %950 = vmatmul.mubr.f32.gmra.mrb[0].mxu0 %v845
        %v951 = vpop.f32.mrb[0].mxu0
        %v952 = vadd.f32 1e-05, %v951
        %v953 = vpop.f32.mrb[0].mxu0
        %954 = vmatprep.mubr.f32.mxu0 0.0
        %955 = vmatmul.mubr.f32.gmra.mrb[0].mxu0 %v846
        %v956 = vpop.f32.mrb[0].mxu0
        %v957 = vadd.f32 1e-05, %v956
        %v958 = vpop.f32.mrb[0].mxu0
        %959 = vmatprep.mubr.f32.mxu0 0.0
        %960 = vmatmul.mubr.f32.gmra.mrb[0].mxu0 %v847
        %v961 = vpop.f32.mrb[0].mxu0
        %v962 = vadd.f32 1e-05, %v961
        %v963 = vpop.f32.mrb[0].mxu0
        %964 = vmatprep.mubr.f32.mxu0 0.0
        %965 = vmatmul.mubr.f32.gmra.mrb[0].mxu0 %v848
        %v966 = vpop.f32.mrb[0].mxu0
        %v967 = vadd.f32 1e-05, %v966
        %v968 = vpop.f32.mrb[0].mxu0
        %969 = vmatprep.mubr.f32.mxu0 0.0
        %970 = vmatmul.mubr.f32.gmra.mrb[0].mxu0 %v849
        %v971 = vpop.f32.mrb[0].mxu0
        %v972 = vadd.f32 1e-05, %v971
        %v973 = vpop.f32.mrb[0].mxu0
        %974 = vmatprep.mubr.f32.mxu0 0.0
        %975 = vmatmul.mubr.f32.gmra.mrb[0].mxu0 %v850
        %v976 = vpop.f32.mrb[0].mxu0
        %v977 = vadd.f32 1e-05, %v976
        %v978 = vpop.f32.mrb[0].mxu0
        %979 = vmatprep.mubr.f32.mxu0 0.0
        %980 = vmatmul.mubr.f32.gmra.mrb[0].mxu0 %v851
        %v981 = vpop.f32.mrb[0].mxu0
        %v982 = vadd.f32 1e-05, %v981
        %v983 = vpop.f32.mrb[0].mxu0
        %984 = vmatprep.mubr.f32.mxu0 0.0
        %985 = vmatmul.mubr.f32.gmra.mrb[0].mxu0 %v852
        %v986 = vpop.f32.mrb[0].mxu0
        %v987 = vadd.f32 1e-05, %v986
        %v988 = vpop.f32.mrb[0].mxu0
        %989 = vmatprep.mubr.f32.mxu0 0.0
        %990 = vmatmul.mubr.f32.gmra.mrb[0].mxu0 %v853
        %v991 = vpop.f32.mrb[0].mxu0
        %v992 = vadd.f32 1e-05, %v991
        %v993 = vpop.f32.mrb[0].mxu0
        %994 = vmatprep.mubr.f32.mxu0 0.0
        %995 = vmatmul.mubr.f32.gmra.mrb[0].mxu0 %v854
        %v996 = vpop.f32.mrb[0].mxu0
        %v997 = vadd.f32 1e-05, %v996
        %v998 = vpop.f32.mrb[0].mxu0
        %999 = vmatprep.mubr.f32.mxu0 0.0
        %1000 = vmatmul.mubr.f32.gmra.mrb[0].mxu0 %v855
        %v1001 = vpop.f32.mrb[0].mxu0
        %v1002 = vadd.f32 1e-05, %v1001
        %v1003 = vpop.f32.mrb[0].mxu0
        %1004 = vmatprep.mubr.f32.mxu0 0.0
        %1005 = vmatmul.mubr.f32.gmra.mrb[0].mxu0 %v856
        %v1006 = vpop.f32.mrb[0].mxu0
        %v1007 = vadd.f32 1e-05, %v1006
        %v1008 = vpop.f32.mrb[0].mxu0
        %1009 = vmatprep.mubr.f32.mxu0 0.0
        %1010 = vmatmul.mubr.f32.gmra.mrb[0].mxu0 %v857
        %v1011 = vpop.f32.mrb[0].mxu0
        %v1012 = vadd.f32 1e-05, %v1011
        %v1013 = vpop.f32.mrb[0].mxu0
        %1014 = vmatprep.mubr.f32.mxu0 0.0
        %1015 = vmatmul.mubr.f32.gmra.mrb[0].mxu0 %v858
        %v1016 = vpop.f32.mrb[0].mxu0
        %v1017 = vadd.f32 1e-05, %v1016
        %v1018 = vpop.f32.mrb[0].mxu0
        %1019 = vmatprep.mubr.f32.mxu0 0.0
        %1020 = vmatmul.mubr.f32.gmra.mrb[0].mxu0 %v859
        %v1021 = vpop.f32.mrb[0].mxu0
        %v1022 = vadd.f32 1e-05, %v1021
        %v1023 = vpop.f32.mrb[0].mxu0
        %1024 = vmatprep.mubr.f32.mxu0 0.0
        %1025 = vmatmul.mubr.f32.gmra.mrb[0].mxu0 %v860
        %v1026 = vpop.f32.mrb[0].mxu0
        %v1027 = vadd.f32 1e-05, %v1026
        %v1028 = vpop.f32.mrb[0].mxu0
        %1029 = vmatprep.mubr.f32.mxu0 0.0
        %1030 = vmatmul.mubr.f32.gmra.mrb[0].mxu0 %v861
        %v1031 = vpop.f32.mrb[0].mxu0
        %v1032 = vadd.f32 1e-05, %v1031
        %v1033 = vpop.f32.mrb[0].mxu0
        %1034 = vmatprep.mubr.f32.mxu0 0.0
        %1035 = vmatmul.mubr.f32.gmra.mrb[0].mxu0 %v862
        %v1036 = vpop.f32.mrb[0].mxu0
        %v1037 = vadd.f32 1e-05, %v1036
        %v1038 = vpop.f32.mrb[0].mxu0
        %1039 = vmatprep.mubr.f32.mxu0 0.0
        %1040 = vmatmul.mubr.f32.gmra.mrb[0].mxu0 %v863
        %v1041 = vpop.f32.mrb[0].mxu0
        %v1042 = vadd.f32 1e-05, %v1041
        %v1043 = vpop.f32.mrb[0].mxu0
        %1044 = vmatprep.mubr.f32.mxu0 0.0
        %1045 = vmatmul.mubr.f32.gmra.mrb[0].mxu0 %v864
        %v1046 = vpop.f32.mrb[0].mxu0
        %v1047 = vadd.f32 1e-05, %v1046
        %v1048 = vpop.f32.mrb[0].mxu0
        %1049 = vmatprep.mubr.f32.mxu0 0.0
        %1050 = vmatmul.mubr.f32.gmra.mrb[0].mxu0 %v865
        %v1051 = vpop.f32.mrb[0].mxu0
        %v1052 = vadd.f32 1e-05, %v1051
        %v1053 = vpop.f32.mrb[0].mxu0
        %1054 = vmatprep.mubr.f32.mxu0 0.0
        %1055 = vmatmul.mubr.f32.gmra.mrb[0].mxu0 %v866
        %v1056 = vpop.f32.mrb[0].mxu0
        %v1057 = vadd.f32 1e-05, %v1056
        %v1058 = vpop.f32.mrb[0].mxu0
        %1059 = vmatprep.mubr.f32.mxu0 0.0
        %1060 = vmatmul.mubr.f32.gmra.mrb[0].mxu0 %v867
        %v1061 = vpop.f32.mrb[0].mxu0
        %v1062 = vadd.f32 1e-05, %v1061
        %v1063 = vpop.f32.mrb[0].mxu0
        %1064 = vmatprep.mubr.f32.mxu0 0.0
        %1065 = vmatmul.mubr.f32.gmra.mrb[0].mxu0 %v868
        %v1066 = vpop.f32.mrb[0].mxu0
        %v1067 = vadd.f32 1e-05, %v1066
        %v1068 = vpop.f32.mrb[0].mxu0
        %1069 = vmatprep.mubr.f32.mxu0 0.0
        %1070 = vmatmul.mubr.f32.gmra.mrb[0].mxu0 %v869
        %v1071 = vpop.f32.mrb[0].mxu0
        %v1072 = vadd.f32 1e-05, %v1071
        %v1073 = vpop.f32.mrb[0].mxu0
        %1074 = vmatprep.mubr.f32.mxu0 0.0
        %1075 = vmatmul.mubr.f32.gmra.mrb[0].mxu0 %v870
        %v1076 = vpop.f32.mrb[0].mxu0
        %v1077 = vadd.f32 1e-05, %v1076
        %v1078 = vpop.f32.mrb[0].mxu0
        %1079 = vmatprep.mubr.f32.mxu0 0.0
        %1080 = vmatmul.mubr.f32.gmra.mrb[0].mxu0 %v871
        %v1081 = vpop.f32.mrb[0].mxu0
        %v1082 = vadd.f32 1e-05, %v1081
        %v1083 = vpop.f32.mrb[0].mxu0
        %1084 = vmatprep.mubr.f32.mxu0 0.0
        %1085 = vmatmul.mubr.f32.gmra.mrb[0].mxu0 %v872
        %v1086 = vpop.f32.mrb[0].mxu0
        %v1087 = vadd.f32 1e-05, %v1086
        %v1088 = vpop.f32.mrb[0].mxu0
        %1089 = vmatprep.mubr.f32.mxu0 0.0
        %1090 = vmatmul.mubr.f32.gmra.mrb[0].mxu0 %v873
        %v1091 = vpop.f32.mrb[0].mxu0
        %v1092 = vadd.f32 1e-05, %v1091
        %v1093 = vpop.f32.mrb[0].mxu0
        %1094 = vmatprep.mubr.f32.mxu0 0.0
        %1095 = vmatmul.mubr.f32.gmra.mrb[0].mxu0 %v874
        %v1096 = vpop.f32.mrb[0].mxu0
        %v1097 = vadd.f32 1e-05, %v1096
        %v1098 = vpop.f32.mrb[0].mxu0
        %1099 = vdwg.mxu0
        %v1100 = vrsqrt.pop %v942
        %v1101 = vrsqrt.pop %v947
        %v1102 = vrsqrt.pop %v952
        %v1103 = vrsqrt.pop %v957
        %v1104 = vrsqrt.pop %v962
        %v1105 = vrsqrt.pop %v967
        %v1106 = vrsqrt.pop %v972
        %v1107 = vrsqrt.pop %v977
        %v1108 = vrsqrt.pop %v982
        %v1109 = vrsqrt.pop %v987
        %v1110 = vrsqrt.pop %v992
        %v1111 = vrsqrt.pop %v997
        %v1112 = vrsqrt.pop %v1002
        %v1113 = vrsqrt.pop %v1007
        %v1114 = vrsqrt.pop %v1012
        %v1115 = vrsqrt.pop %v1017
        %v1116 = vrsqrt.pop %v1022
        %v1117 = vrsqrt.pop %v1027
        %v1118 = vrsqrt.pop %v1032
        %v1119 = vrsqrt.pop %v1037
        %v1120 = vrsqrt.pop %v1042
        %v1121 = vrsqrt.pop %v1047
        %v1122 = vrsqrt.pop %v1052
        %v1123 = vrsqrt.pop %v1057
        %v1124 = vrsqrt.pop %v1062
        %v1125 = vrsqrt.pop %v1067
        %v1126 = vrsqrt.pop %v1072
        %v1127 = vrsqrt.pop %v1077
        %v1128 = vrsqrt.pop %v1082
        %v1129 = vrsqrt.pop %v1087
        %v1130 = vrsqrt.pop %v1092
        %v1131 = vrsqrt.pop %v1097
        %v1132 = vmul.f32 %v474, %v1100
        %v1133 = vmul.f32 %v478, %v1101
        %v1134 = vmul.f32 %v484, %v1102
        %v1135 = vmul.f32 %v488, %v1103
        %v1136 = vmul.f32 %v494, %v1104
        %v1137 = vmul.f32 %v498, %v1105
        %v1138 = vmul.f32 %v504, %v1106
        %v1139 = vmul.f32 %v508, %v1107
        %v1140 = vmul.f32 %v514, %v1108
        %v1141 = vmul.f32 %v518, %v1109
        %v1142 = vmul.f32 %v524, %v1110
        %v1143 = vmul.f32 %v528, %v1111
        %v1144 = vmul.f32 %v534, %v1112
        %v1145 = vmul.f32 %v538, %v1113
        %v1146 = vmul.f32 %v544, %v1114
        %v1147 = vmul.f32 %v548, %v1115
        %v1148 = vmul.f32 %v554, %v1116
        %v1149 = vmul.f32 %v558, %v1117
        %v1150 = vmul.f32 %v564, %v1118
        %v1151 = vmul.f32 %v568, %v1119
        %v1152 = vmul.f32 %v574, %v1120
        %v1153 = vmul.f32 %v578, %v1121
        %v1154 = vmul.f32 %v584, %v1122
        %v1155 = vmul.f32 %v588, %v1123
        %v1156 = vmul.f32 %v594, %v1124
        %v1157 = vmul.f32 %v598, %v1125
        %v1158 = vmul.f32 %v604, %v1126
        %v1159 = vmul.f32 %v608, %v1127
        %v1160 = vmul.f32 %v614, %v1128
        %v1161 = vmul.f32 %v618, %v1129
        %v1162 = vmul.f32 %v624, %v1130
        %v1163 = vmul.f32 %v628, %v1131
        %v1165 = vlaneseq
        %v1166 = vshrl.u32 %v1165, 7
        %v1167 = vsub.s32 0, %v1166
        %v1168 = vrot.slane %v825, %v1167
        %v1170 = vmul.f32 %v1132, %v1168
        %v1171 = vmul.f32 %v1133, %v1168
        %v1172 = vmul.f32 %v1134, %v1168
        %v1173 = vmul.f32 %v1135, %v1168
        %v1174 = vmul.f32 %v1136, %v1168
        %v1175 = vmul.f32 %v1137, %v1168
        %v1176 = vmul.f32 %v1138, %v1168
        %v1177 = vmul.f32 %v1139, %v1168
        %v1178 = vmul.f32 %v1140, %v1168
        %v1179 = vmul.f32 %v1141, %v1168
        %v1180 = vmul.f32 %v1142, %v1168
        %v1181 = vmul.f32 %v1143, %v1168
        %v1182 = vmul.f32 %v1144, %v1168
        %v1183 = vmul.f32 %v1145, %v1168
        %v1184 = vmul.f32 %v1146, %v1168
        %v1185 = vmul.f32 %v1147, %v1168
        %v1186 = vmul.f32 %v1148, %v1168
        %v1187 = vmul.f32 %v1149, %v1168
        %v1188 = vmul.f32 %v1150, %v1168
        %v1189 = vmul.f32 %v1151, %v1168
        %v1190 = vmul.f32 %v1152, %v1168
        %v1191 = vmul.f32 %v1153, %v1168
        %v1192 = vmul.f32 %v1154, %v1168
        %v1193 = vmul.f32 %v1155, %v1168
        %v1194 = vmul.f32 %v1156, %v1168
        %v1195 = vmul.f32 %v1157, %v1168
        %v1196 = vmul.f32 %v1158, %v1168
        %v1197 = vmul.f32 %v1159, %v1168
        %v1198 = vmul.f32 %v1160, %v1168
        %v1199 = vmul.f32 %v1161, %v1168
        %v1200 = vmul.f32 %v1162, %v1168
        %v1201 = vmul.f32 %v1163, %v1168
        %v1203 = vlaneseq
        %v1204 = vshrl.u32 %v1203, 7
        %v1205 = vsub.s32 0, %v1204
        %v1206 = vrot.slane %v826, %v1205
        %v1208 = vadd.f32 %v1170, %v1206
        %v1209 = vadd.f32 %v1171, %v1206
        %v1210 = vadd.f32 %v1172, %v1206
        %v1211 = vadd.f32 %v1173, %v1206
        %v1212 = vadd.f32 %v1174, %v1206
        %v1213 = vadd.f32 %v1175, %v1206
        %v1214 = vadd.f32 %v1176, %v1206
        %v1215 = vadd.f32 %v1177, %v1206
        %v1216 = vadd.f32 %v1178, %v1206
        %v1217 = vadd.f32 %v1179, %v1206
        %v1218 = vadd.f32 %v1180, %v1206
        %v1219 = vadd.f32 %v1181, %v1206
        %v1220 = vadd.f32 %v1182, %v1206
        %v1221 = vadd.f32 %v1183, %v1206
        %v1222 = vadd.f32 %v1184, %v1206
        %v1223 = vadd.f32 %v1185, %v1206
        %v1224 = vadd.f32 %v1186, %v1206
        %v1225 = vadd.f32 %v1187, %v1206
        %v1226 = vadd.f32 %v1188, %v1206
        %v1227 = vadd.f32 %v1189, %v1206
        %v1228 = vadd.f32 %v1190, %v1206
        %v1229 = vadd.f32 %v1191, %v1206
        %v1230 = vadd.f32 %v1192, %v1206
        %v1231 = vadd.f32 %v1193, %v1206
        %v1232 = vadd.f32 %v1194, %v1206
        %v1233 = vadd.f32 %v1195, %v1206
        %v1234 = vadd.f32 %v1196, %v1206
        %v1235 = vadd.f32 %v1197, %v1206
        %v1236 = vadd.f32 %v1198, %v1206
        %v1237 = vadd.f32 %v1199, %v1206
        %v1238 = vadd.f32 %v1200, %v1206
        %v1239 = vadd.f32 %v1201, %v1206
        %1240 = vst [vmem:[%s290] sm:$0xff] %v1208
        %1241 = vst [vmem:[%s290 + $0x8] sm:$0xff] %v1209
        %1242 = vst [vmem:[%s290 + $0x40] sm:$0xff] %v1210
        %1243 = vst [vmem:[%s290 + $0x48] sm:$0xff] %v1211
        %1244 = vst [vmem:[%s290 + $0x80] sm:$0xff] %v1212
        %1245 = vst [vmem:[%s290 + $0x88] sm:$0xff] %v1213
        %1246 = vst [vmem:[%s290 + $0xc0] sm:$0xff] %v1214
        %1247 = vst [vmem:[%s290 + $0xc8] sm:$0xff] %v1215
        %1248 = vst [vmem:[%s290 + $0x100] sm:$0xff] %v1216
        %1249 = vst [vmem:[%s290 + $0x108] sm:$0xff] %v1217
        %1250 = vst [vmem:[%s290 + $0x140] sm:$0xff] %v1218
        %1251 = vst [vmem:[%s290 + $0x148] sm:$0xff] %v1219
        %1252 = vst [vmem:[%s290 + $0x180] sm:$0xff] %v1220
        %1253 = vst [vmem:[%s290 + $0x188] sm:$0xff] %v1221
        %1254 = vst [vmem:[%s290 + $0x1c0] sm:$0xff] %v1222
        %1255 = vst [vmem:[%s290 + $0x1c8] sm:$0xff] %v1223
        %1256 = vst [vmem:[%s290 + $0x200] sm:$0xff] %v1224
        %1257 = vst [vmem:[%s290 + $0x208] sm:$0xff] %v1225
        %1258 = vst [vmem:[%s290 + $0x240] sm:$0xff] %v1226
        %1259 = vst [vmem:[%s290 + $0x248] sm:$0xff] %v1227
        %1260 = vst [vmem:[%s290 + $0x280] sm:$0xff] %v1228
        %1261 = vst [vmem:[%s290 + $0x288] sm:$0xff] %v1229
        %1262 = vst [vmem:[%s290 + $0x2c0] sm:$0xff] %v1230
        %1263 = vst [vmem:[%s290 + $0x2c8] sm:$0xff] %v1231
        %1264 = vst [vmem:[%s290 + $0x300] sm:$0xff] %v1232
        %1265 = vst [vmem:[%s290 + $0x308] sm:$0xff] %v1233
        %1266 = vst [vmem:[%s290 + $0x340] sm:$0xff] %v1234
        %1267 = vst [vmem:[%s290 + $0x348] sm:$0xff] %v1235
        %1268 = vst [vmem:[%s290 + $0x380] sm:$0xff] %v1236
        %1269 = vst [vmem:[%s290 + $0x388] sm:$0xff] %v1237
        %1270 = vst [vmem:[%s290 + $0x3c0] sm:$0xff] %v1238
        %1271 = vst [vmem:[%s290 + $0x3c8] sm:$0xff] %v1239
        %v1272 = vmul.f32 %v476, %v476
        %v1273 = vmul.f32 %v480, %v480
        %v1274 = vmul.f32 %v486, %v486
        %v1275 = vmul.f32 %v490, %v490
        %v1276 = vmul.f32 %v496, %v496
        %v1277 = vmul.f32 %v500, %v500
        %v1278 = vmul.f32 %v506, %v506
        %v1279 = vmul.f32 %v510, %v510
        %v1280 = vmul.f32 %v516, %v516
        %v1281 = vmul.f32 %v520, %v520
        %v1282 = vmul.f32 %v526, %v526
        %v1283 = vmul.f32 %v530, %v530
        %v1284 = vmul.f32 %v536, %v536
        %v1285 = vmul.f32 %v540, %v540
        %v1286 = vmul.f32 %v546, %v546
        %v1287 = vmul.f32 %v550, %v550
        %v1288 = vmul.f32 %v556, %v556
        %v1289 = vmul.f32 %v560, %v560
        %v1290 = vmul.f32 %v566, %v566
        %v1291 = vmul.f32 %v570, %v570
        %v1292 = vmul.f32 %v576, %v576
        %v1293 = vmul.f32 %v580, %v580
        %v1294 = vmul.f32 %v586, %v586
        %v1295 = vmul.f32 %v590, %v590
        %v1296 = vmul.f32 %v596, %v596
        %v1297 = vmul.f32 %v600, %v600
        %v1298 = vmul.f32 %v606, %v606
        %v1299 = vmul.f32 %v610, %v610
        %v1300 = vmul.f32 %v616, %v616
        %v1301 = vmul.f32 %v620, %v620
        %v1302 = vmul.f32 %v626, %v626
        %v1303 = vmul.f32 %v630, %v630
        %1304 = vmatprep.subr.mxu0 0.0
        %1305 = vmatpush1.msra.mxu0 %v827
        %1306 = vmatprep.subr.mxu0 0.0
        %1307 = vmatpush1.msra.mxu0 %v828
        %1308 = vmatprep.subr.mxu0 0.0
        %1309 = vmatpush1.msra.mxu0 %v829
        %1310 = vmatprep.subr.mxu0 0.0
        %1311 = vmatpush1.msra.mxu0 %v830
        %1312 = vmatprep.subr.mxu0 0.0
        %1313 = vmatpush1.msra.mxu0 %v831
        %1314 = vmatprep.subr.mxu0 0.0
        %1315 = vmatpush1.msra.mxu0 %v832
        %1316 = vmatprep.subr.mxu0 0.0
        %1317 = vmatpush1.msra.mxu0 %v833
        %1318 = vmatprep.subr.mxu0 0.0
        %1319 = vmatpush1.msra.mxu0 %v834
        %1320 = vmatprep.subr.mxu0 0.0
        %1321 = vmatpush1.msra.mxu0 %v835
        %1322 = vmatprep.subr.mxu0 0.0
        %1323 = vmatpush1.msra.mxu0 %v836
        %1324 = vmatprep.subr.mxu0 0.0
        %1325 = vmatpush1.msra.mxu0 %v837
        %1326 = vmatprep.subr.mxu0 0.0
        %1327 = vmatpush1.msra.mxu0 %v838
        %1328 = vmatprep.subr.mxu0 0.0
        %1329 = vmatpush1.msra.mxu0 %v839
        %1330 = vmatprep.subr.mxu0 0.0
        %1331 = vmatpush1.msra.mxu0 %v840
        %1332 = vmatprep.subr.mxu0 0.0
        %1333 = vmatpush1.msra.mxu0 %v841
        %1334 = vmatprep.subr.mxu0 0.0
        %1335 = vmatpush1.msra.mxu0 %v842
        %1336 = vmatprep.subr.mxu0 0.0
        %1337 = vmatpush1.msra.mxu0 0.0
        %1338 = vmatprep.subr.mxu0 0.0
        %1339 = vmatpush1.msra.mxu0 0.0
        %1340 = vmatprep.subr.mxu0 0.0
        %1341 = vmatpush1.msra.mxu0 0.0
        %1342 = vmatprep.subr.mxu0 0.0
        %1343 = vmatpush1.msra.mxu0 0.0
        %1344 = vmatprep.subr.mxu0 0.0
        %1345 = vmatpush1.msra.mxu0 0.0
        %1346 = vmatprep.subr.mxu0 0.0
        %1347 = vmatpush1.msra.mxu0 0.0
        %1348 = vmatprep.subr.mxu0 0.0
        %1349 = vmatpush1.msra.mxu0 0.0
        %1350 = vmatprep.subr.mxu0 0.0
        %1351 = vmatpush1.msra.mxu0 0.0
        %1352 = vmatprep.subr.mxu0 0.0
        %1353 = vmatpush1.msra.mxu0 0.0
        %1354 = vmatprep.subr.mxu0 0.0
        %1355 = vmatpush1.msra.mxu0 0.0
        %1356 = vmatprep.subr.mxu0 0.0
        %1357 = vmatpush1.msra.mxu0 0.0
        %1358 = vmatprep.subr.mxu0 0.0
        %1359 = vmatpush1.msra.mxu0 0.0
        %1360 = vmatprep.subr.mxu0 0.0
        %1361 = vmatpush1.msra.mxu0 0.0
        %1362 = vmatprep.subr.mxu0 0.0
        %1363 = vmatpush1.msra.mxu0 0.0
        %1364 = vmatprep.subr.mxu0 0.0
        %1365 = vmatpush1.msra.mxu0 0.0
        %1366 = vmatprep.subr.mxu0 0.0
        %1367 = vmatpush1.msra.mxu0 0.0
        %1368 = vmatprep.mubr.f32.mxu0 0.0
        %1369 = vmatmul.mubr.f32.gmra.mrb[0].mxu0 %v1272
        %v1370 = vpop.f32.mrb[0].mxu0
        %v1371 = vadd.f32 1e-05, %v1370
        %v1372 = vpop.f32.mrb[0].mxu0
        %1373 = vmatprep.mubr.f32.mxu0 0.0
        %1374 = vmatmul.mubr.f32.gmra.mrb[0].mxu0 %v1273
        %v1375 = vpop.f32.mrb[0].mxu0
        %v1376 = vadd.f32 1e-05, %v1375
        %v1377 = vpop.f32.mrb[0].mxu0
        %1378 = vmatprep.mubr.f32.mxu0 0.0
        %1379 = vmatmul.mubr.f32.gmra.mrb[0].mxu0 %v1274
        %v1380 = vpop.f32.mrb[0].mxu0
        %v1381 = vadd.f32 1e-05, %v1380
        %v1382 = vpop.f32.mrb[0].mxu0
        %1383 = vmatprep.mubr.f32.mxu0 0.0
        %1384 = vmatmul.mubr.f32.gmra.mrb[0].mxu0 %v1275
        %v1385 = vpop.f32.mrb[0].mxu0
        %v1386 = vadd.f32 1e-05, %v1385
        %v1387 = vpop.f32.mrb[0].mxu0
        %1388 = vmatprep.mubr.f32.mxu0 0.0
        %1389 = vmatmul.mubr.f32.gmra.mrb[0].mxu0 %v1276
        %v1390 = vpop.f32.mrb[0].mxu0
        %v1391 = vadd.f32 1e-05, %v1390
        %v1392 = vpop.f32.mrb[0].mxu0
        %1393 = vmatprep.mubr.f32.mxu0 0.0
        %1394 = vmatmul.mubr.f32.gmra.mrb[0].mxu0 %v1277
        %v1395 = vpop.f32.mrb[0].mxu0
        %v1396 = vadd.f32 1e-05, %v1395
        %v1397 = vpop.f32.mrb[0].mxu0
        %1398 = vmatprep.mubr.f32.mxu0 0.0
        %1399 = vmatmul.mubr.f32.gmra.mrb[0].mxu0 %v1278
        %v1400 = vpop.f32.mrb[0].mxu0
        %v1401 = vadd.f32 1e-05, %v1400
        %v1402 = vpop.f32.mrb[0].mxu0
        %1403 = vmatprep.mubr.f32.mxu0 0.0
        %1404 = vmatmul.mubr.f32.gmra.mrb[0].mxu0 %v1279
        %v1405 = vpop.f32.mrb[0].mxu0
        %v1406 = vadd.f32 1e-05, %v1405
        %v1407 = vpop.f32.mrb[0].mxu0
        %1408 = vmatprep.mubr.f32.mxu0 0.0
        %1409 = vmatmul.mubr.f32.gmra.mrb[0].mxu0 %v1280
        %v1410 = vpop.f32.mrb[0].mxu0
        %v1411 = vadd.f32 1e-05, %v1410
        %v1412 = vpop.f32.mrb[0].mxu0
        %1413 = vmatprep.mubr.f32.mxu0 0.0
        %1414 = vmatmul.mubr.f32.gmra.mrb[0].mxu0 %v1281
        %v1415 = vpop.f32.mrb[0].mxu0
        %v1416 = vadd.f32 1e-05, %v1415
        %v1417 = vpop.f32.mrb[0].mxu0
        %1418 = vmatprep.mubr.f32.mxu0 0.0
        %1419 = vmatmul.mubr.f32.gmra.mrb[0].mxu0 %v1282
        %v1420 = vpop.f32.mrb[0].mxu0
        %v1421 = vadd.f32 1e-05, %v1420
        %v1422 = vpop.f32.mrb[0].mxu0
        %1423 = vmatprep.mubr.f32.mxu0 0.0
        %1424 = vmatmul.mubr.f32.gmra.mrb[0].mxu0 %v1283
        %v1425 = vpop.f32.mrb[0].mxu0
        %v1426 = vadd.f32 1e-05, %v1425
        %v1427 = vpop.f32.mrb[0].mxu0
        %1428 = vmatprep.mubr.f32.mxu0 0.0
        %1429 = vmatmul.mubr.f32.gmra.mrb[0].mxu0 %v1284
        %v1430 = vpop.f32.mrb[0].mxu0
        %v1431 = vadd.f32 1e-05, %v1430
        %v1432 = vpop.f32.mrb[0].mxu0
        %1433 = vmatprep.mubr.f32.mxu0 0.0
        %1434 = vmatmul.mubr.f32.gmra.mrb[0].mxu0 %v1285
        %v1435 = vpop.f32.mrb[0].mxu0
        %v1436 = vadd.f32 1e-05, %v1435
        %v1437 = vpop.f32.mrb[0].mxu0
        %1438 = vmatprep.mubr.f32.mxu0 0.0
        %1439 = vmatmul.mubr.f32.gmra.mrb[0].mxu0 %v1286
        %v1440 = vpop.f32.mrb[0].mxu0
        %v1441 = vadd.f32 1e-05, %v1440
        %v1442 = vpop.f32.mrb[0].mxu0
        %1443 = vmatprep.mubr.f32.mxu0 0.0
        %1444 = vmatmul.mubr.f32.gmra.mrb[0].mxu0 %v1287
        %v1445 = vpop.f32.mrb[0].mxu0
        %v1446 = vadd.f32 1e-05, %v1445
        %v1447 = vpop.f32.mrb[0].mxu0
        %1448 = vmatprep.mubr.f32.mxu0 0.0
        %1449 = vmatmul.mubr.f32.gmra.mrb[0].mxu0 %v1288
        %v1450 = vpop.f32.mrb[0].mxu0
        %v1451 = vadd.f32 1e-05, %v1450
        %v1452 = vpop.f32.mrb[0].mxu0
        %1453 = vmatprep.mubr.f32.mxu0 0.0
        %1454 = vmatmul.mubr.f32.gmra.mrb[0].mxu0 %v1289
        %v1455 = vpop.f32.mrb[0].mxu0
        %v1456 = vadd.f32 1e-05, %v1455
        %v1457 = vpop.f32.mrb[0].mxu0
        %1458 = vmatprep.mubr.f32.mxu0 0.0
        %1459 = vmatmul.mubr.f32.gmra.mrb[0].mxu0 %v1290
        %v1460 = vpop.f32.mrb[0].mxu0
        %v1461 = vadd.f32 1e-05, %v1460
        %v1462 = vpop.f32.mrb[0].mxu0
        %1463 = vmatprep.mubr.f32.mxu0 0.0
        %1464 = vmatmul.mubr.f32.gmra.mrb[0].mxu0 %v1291
        %v1465 = vpop.f32.mrb[0].mxu0
        %v1466 = vadd.f32 1e-05, %v1465
        %v1467 = vpop.f32.mrb[0].mxu0
        %1468 = vmatprep.mubr.f32.mxu0 0.0
        %1469 = vmatmul.mubr.f32.gmra.mrb[0].mxu0 %v1292
        %v1470 = vpop.f32.mrb[0].mxu0
        %v1471 = vadd.f32 1e-05, %v1470
        %v1472 = vpop.f32.mrb[0].mxu0
        %1473 = vmatprep.mubr.f32.mxu0 0.0
        %1474 = vmatmul.mubr.f32.gmra.mrb[0].mxu0 %v1293
        %v1475 = vpop.f32.mrb[0].mxu0
        %v1476 = vadd.f32 1e-05, %v1475
        %v1477 = vpop.f32.mrb[0].mxu0
        %1478 = vmatprep.mubr.f32.mxu0 0.0
        %1479 = vmatmul.mubr.f32.gmra.mrb[0].mxu0 %v1294
        %v1480 = vpop.f32.mrb[0].mxu0
        %v1481 = vadd.f32 1e-05, %v1480
        %v1482 = vpop.f32.mrb[0].mxu0
        %1483 = vmatprep.mubr.f32.mxu0 0.0
        %1484 = vmatmul.mubr.f32.gmra.mrb[0].mxu0 %v1295
        %v1485 = vpop.f32.mrb[0].mxu0
        %v1486 = vadd.f32 1e-05, %v1485
        %v1487 = vpop.f32.mrb[0].mxu0
        %1488 = vmatprep.mubr.f32.mxu0 0.0
        %1489 = vmatmul.mubr.f32.gmra.mrb[0].mxu0 %v1296
        %v1490 = vpop.f32.mrb[0].mxu0
        %v1491 = vadd.f32 1e-05, %v1490
        %v1492 = vpop.f32.mrb[0].mxu0
        %1493 = vmatprep.mubr.f32.mxu0 0.0
        %1494 = vmatmul.mubr.f32.gmra.mrb[0].mxu0 %v1297
        %v1495 = vpop.f32.mrb[0].mxu0
        %v1496 = vadd.f32 1e-05, %v1495
        %v1497 = vpop.f32.mrb[0].mxu0
        %1498 = vmatprep.mubr.f32.mxu0 0.0
        %1499 = vmatmul.mubr.f32.gmra.mrb[0].mxu0 %v1298
        %v1500 = vpop.f32.mrb[0].mxu0
        %v1501 = vadd.f32 1e-05, %v1500
        %v1502 = vpop.f32.mrb[0].mxu0
        %1503 = vmatprep.mubr.f32.mxu0 0.0
        %1504 = vmatmul.mubr.f32.gmra.mrb[0].mxu0 %v1299
        %v1505 = vpop.f32.mrb[0].mxu0
        %v1506 = vadd.f32 1e-05, %v1505
        %v1507 = vpop.f32.mrb[0].mxu0
        %1508 = vmatprep.mubr.f32.mxu0 0.0
        %1509 = vmatmul.mubr.f32.gmra.mrb[0].mxu0 %v1300
        %v1510 = vpop.f32.mrb[0].mxu0
        %v1511 = vadd.f32 1e-05, %v1510
        %v1512 = vpop.f32.mrb[0].mxu0
        %1513 = vmatprep.mubr.f32.mxu0 0.0
        %1514 = vmatmul.mubr.f32.gmra.mrb[0].mxu0 %v1301
        %v1515 = vpop.f32.mrb[0].mxu0
        %v1516 = vadd.f32 1e-05, %v1515
        %v1517 = vpop.f32.mrb[0].mxu0
        %1518 = vmatprep.mubr.f32.mxu0 0.0
        %1519 = vmatmul.mubr.f32.gmra.mrb[0].mxu0 %v1302
        %v1520 = vpop.f32.mrb[0].mxu0
        %v1521 = vadd.f32 1e-05, %v1520
        %v1522 = vpop.f32.mrb[0].mxu0
        %1523 = vmatprep.mubr.f32.mxu0 0.0
        %1524 = vmatmul.mubr.f32.gmra.mrb[0].mxu0 %v1303
        %v1525 = vpop.f32.mrb[0].mxu0
        %v1526 = vadd.f32 1e-05, %v1525
        %v1527 = vpop.f32.mrb[0].mxu0
        %1528 = vdwg.mxu0
        %v1529 = vrsqrt.pop %v1371
        %v1530 = vrsqrt.pop %v1376
        %v1531 = vrsqrt.pop %v1381
        %v1532 = vrsqrt.pop %v1386
        %v1533 = vrsqrt.pop %v1391
        %v1534 = vrsqrt.pop %v1396
        %v1535 = vrsqrt.pop %v1401
        %v1536 = vrsqrt.pop %v1406
        %v1537 = vrsqrt.pop %v1411
        %v1538 = vrsqrt.pop %v1416
        %v1539 = vrsqrt.pop %v1421
        %v1540 = vrsqrt.pop %v1426
        %v1541 = vrsqrt.pop %v1431
        %v1542 = vrsqrt.pop %v1436
        %v1543 = vrsqrt.pop %v1441
        %v1544 = vrsqrt.pop %v1446
        %v1545 = vrsqrt.pop %v1451
        %v1546 = vrsqrt.pop %v1456
        %v1547 = vrsqrt.pop %v1461
        %v1548 = vrsqrt.pop %v1466
        %v1549 = vrsqrt.pop %v1471
        %v1550 = vrsqrt.pop %v1476
        %v1551 = vrsqrt.pop %v1481
        %v1552 = vrsqrt.pop %v1486
        %v1553 = vrsqrt.pop %v1491
        %v1554 = vrsqrt.pop %v1496
        %v1555 = vrsqrt.pop %v1501
        %v1556 = vrsqrt.pop %v1506
        %v1557 = vrsqrt.pop %v1511
        %v1558 = vrsqrt.pop %v1516
        %v1559 = vrsqrt.pop %v1521
        %v1560 = vrsqrt.pop %v1526
        %v1561 = vmul.f32 %v476, %v1529
        %v1562 = vmul.f32 %v480, %v1530
        %v1563 = vmul.f32 %v486, %v1531
        %v1564 = vmul.f32 %v490, %v1532
        %v1565 = vmul.f32 %v496, %v1533
        %v1566 = vmul.f32 %v500, %v1534
        %v1567 = vmul.f32 %v506, %v1535
        %v1568 = vmul.f32 %v510, %v1536
        %v1569 = vmul.f32 %v516, %v1537
        %v1570 = vmul.f32 %v520, %v1538
        %v1571 = vmul.f32 %v526, %v1539
        %v1572 = vmul.f32 %v530, %v1540
        %v1573 = vmul.f32 %v536, %v1541
        %v1574 = vmul.f32 %v540, %v1542
        %v1575 = vmul.f32 %v546, %v1543
        %v1576 = vmul.f32 %v550, %v1544
        %v1577 = vmul.f32 %v556, %v1545
        %v1578 = vmul.f32 %v560, %v1546
        %v1579 = vmul.f32 %v566, %v1547
        %v1580 = vmul.f32 %v570, %v1548
        %v1581 = vmul.f32 %v576, %v1549
        %v1582 = vmul.f32 %v580, %v1550
        %v1583 = vmul.f32 %v586, %v1551
        %v1584 = vmul.f32 %v590, %v1552
        %v1585 = vmul.f32 %v596, %v1553
        %v1586 = vmul.f32 %v600, %v1554
        %v1587 = vmul.f32 %v606, %v1555
        %v1588 = vmul.f32 %v610, %v1556
        %v1589 = vmul.f32 %v616, %v1557
        %v1590 = vmul.f32 %v620, %v1558
        %v1591 = vmul.f32 %v626, %v1559
        %v1592 = vmul.f32 %v630, %v1560
        %v1593 = vmul.f32 %v1561, %v1168
        %v1594 = vmul.f32 %v1562, %v1168
        %v1595 = vmul.f32 %v1563, %v1168
        %v1596 = vmul.f32 %v1564, %v1168
        %v1597 = vmul.f32 %v1565, %v1168
        %v1598 = vmul.f32 %v1566, %v1168
        %v1599 = vmul.f32 %v1567, %v1168
        %v1600 = vmul.f32 %v1568, %v1168
        %v1601 = vmul.f32 %v1569, %v1168
        %v1602 = vmul.f32 %v1570, %v1168
        %v1603 = vmul.f32 %v1571, %v1168
        %v1604 = vmul.f32 %v1572, %v1168
        %v1605 = vmul.f32 %v1573, %v1168
        %v1606 = vmul.f32 %v1574, %v1168
        %v1607 = vmul.f32 %v1575, %v1168
        %v1608 = vmul.f32 %v1576, %v1168
        %v1609 = vmul.f32 %v1577, %v1168
        %v1610 = vmul.f32 %v1578, %v1168
        %v1611 = vmul.f32 %v1579, %v1168
        %v1612 = vmul.f32 %v1580, %v1168
        %v1613 = vmul.f32 %v1581, %v1168
        %v1614 = vmul.f32 %v1582, %v1168
        %v1615 = vmul.f32 %v1583, %v1168
        %v1616 = vmul.f32 %v1584, %v1168
        %v1617 = vmul.f32 %v1585, %v1168
        %v1618 = vmul.f32 %v1586, %v1168
        %v1619 = vmul.f32 %v1587, %v1168
        %v1620 = vmul.f32 %v1588, %v1168
        %v1621 = vmul.f32 %v1589, %v1168
        %v1622 = vmul.f32 %v1590, %v1168
        %v1623 = vmul.f32 %v1591, %v1168
        %v1624 = vmul.f32 %v1592, %v1168
        %v1625 = vadd.f32 %v1593, %v1206
        %v1626 = vadd.f32 %v1594, %v1206
        %v1627 = vadd.f32 %v1595, %v1206
        %v1628 = vadd.f32 %v1596, %v1206
        %v1629 = vadd.f32 %v1597, %v1206
        %v1630 = vadd.f32 %v1598, %v1206
        %v1631 = vadd.f32 %v1599, %v1206
        %v1632 = vadd.f32 %v1600, %v1206
        %v1633 = vadd.f32 %v1601, %v1206
        %v1634 = vadd.f32 %v1602, %v1206
        %v1635 = vadd.f32 %v1603, %v1206
        %v1636 = vadd.f32 %v1604, %v1206
        %v1637 = vadd.f32 %v1605, %v1206
        %v1638 = vadd.f32 %v1606, %v1206
        %v1639 = vadd.f32 %v1607, %v1206
        %v1640 = vadd.f32 %v1608, %v1206
        %v1641 = vadd.f32 %v1609, %v1206
        %v1642 = vadd.f32 %v1610, %v1206
        %v1643 = vadd.f32 %v1611, %v1206
        %v1644 = vadd.f32 %v1612, %v1206
        %v1645 = vadd.f32 %v1613, %v1206
        %v1646 = vadd.f32 %v1614, %v1206
        %v1647 = vadd.f32 %v1615, %v1206
        %v1648 = vadd.f32 %v1616, %v1206
        %v1649 = vadd.f32 %v1617, %v1206
        %v1650 = vadd.f32 %v1618, %v1206
        %v1651 = vadd.f32 %v1619, %v1206
        %v1652 = vadd.f32 %v1620, %v1206
        %v1653 = vadd.f32 %v1621, %v1206
        %v1654 = vadd.f32 %v1622, %v1206
        %v1655 = vadd.f32 %v1623, %v1206
        %v1656 = vadd.f32 %v1624, %v1206
        %s1657 = scalar_lea.vmem %s290, 16 [#allocation8]
        %1658 = vst [vmem:[%s1657] sm:$0xff] %v1625
        %1659 = vst [vmem:[%s1657 + $0x8] sm:$0xff] %v1626
        %1660 = vst [vmem:[%s1657 + $0x40] sm:$0xff] %v1627
        %1661 = vst [vmem:[%s1657 + $0x48] sm:$0xff] %v1628
        %1662 = vst [vmem:[%s1657 + $0x80] sm:$0xff] %v1629
        %1663 = vst [vmem:[%s1657 + $0x88] sm:$0xff] %v1630
        %1664 = vst [vmem:[%s1657 + $0xc0] sm:$0xff] %v1631
        %1665 = vst [vmem:[%s1657 + $0xc8] sm:$0xff] %v1632
        %1666 = vst [vmem:[%s1657 + $0x100] sm:$0xff] %v1633
        %1667 = vst [vmem:[%s1657 + $0x108] sm:$0xff] %v1634
        %1668 = vst [vmem:[%s1657 + $0x140] sm:$0xff] %v1635
        %1669 = vst [vmem:[%s1657 + $0x148] sm:$0xff] %v1636
        %1670 = vst [vmem:[%s1657 + $0x180] sm:$0xff] %v1637
        %1671 = vst [vmem:[%s1657 + $0x188] sm:$0xff] %v1638
        %1672 = vst [vmem:[%s1657 + $0x1c0] sm:$0xff] %v1639
        %1673 = vst [vmem:[%s1657 + $0x1c8] sm:$0xff] %v1640
        %1674 = vst [vmem:[%s1657 + $0x200] sm:$0xff] %v1641
        %1675 = vst [vmem:[%s1657 + $0x208] sm:$0xff] %v1642
        %1676 = vst [vmem:[%s1657 + $0x240] sm:$0xff] %v1643
        %1677 = vst [vmem:[%s1657 + $0x248] sm:$0xff] %v1644
        %1678 = vst [vmem:[%s1657 + $0x280] sm:$0xff] %v1645
        %1679 = vst [vmem:[%s1657 + $0x288] sm:$0xff] %v1646
        %1680 = vst [vmem:[%s1657 + $0x2c0] sm:$0xff] %v1647
        %1681 = vst [vmem:[%s1657 + $0x2c8] sm:$0xff] %v1648
        %1682 = vst [vmem:[%s1657 + $0x300] sm:$0xff] %v1649
        %1683 = vst [vmem:[%s1657 + $0x308] sm:$0xff] %v1650
        %1684 = vst [vmem:[%s1657 + $0x340] sm:$0xff] %v1651
        %1685 = vst [vmem:[%s1657 + $0x348] sm:$0xff] %v1652
        %1686 = vst [vmem:[%s1657 + $0x380] sm:$0xff] %v1653
        %1687 = vst [vmem:[%s1657 + $0x388] sm:$0xff] %v1654
        %1688 = vst [vmem:[%s1657 + $0x3c0] sm:$0xff] %v1655
        %1689 = vst [vmem:[%s1657 + $0x3c8] sm:$0xff] %v1656
        %v1690 = vmul.f32 %v667, %v667
        %v1691 = vmul.f32 %v671, %v671
        %v1692 = vmul.f32 %v677, %v677
        %v1693 = vmul.f32 %v681, %v681
        %v1694 = vmul.f32 %v687, %v687
        %v1695 = vmul.f32 %v691, %v691
        %v1696 = vmul.f32 %v697, %v697
        %v1697 = vmul.f32 %v701, %v701
        %v1698 = vmul.f32 %v707, %v707
        %v1699 = vmul.f32 %v711, %v711
        %v1700 = vmul.f32 %v717, %v717
        %v1701 = vmul.f32 %v721, %v721
        %v1702 = vmul.f32 %v727, %v727
        %v1703 = vmul.f32 %v731, %v731
        %v1704 = vmul.f32 %v737, %v737
        %v1705 = vmul.f32 %v741, %v741
        %v1706 = vmul.f32 %v747, %v747
        %v1707 = vmul.f32 %v751, %v751
        %v1708 = vmul.f32 %v757, %v757
        %v1709 = vmul.f32 %v761, %v761
        %v1710 = vmul.f32 %v767, %v767
        %v1711 = vmul.f32 %v771, %v771
        %v1712 = vmul.f32 %v777, %v777
        %v1713 = vmul.f32 %v781, %v781
        %v1714 = vmul.f32 %v787, %v787
        %v1715 = vmul.f32 %v791, %v791
        %v1716 = vmul.f32 %v797, %v797
        %v1717 = vmul.f32 %v801, %v801
        %v1718 = vmul.f32 %v807, %v807
        %v1719 = vmul.f32 %v811, %v811
        %v1720 = vmul.f32 %v817, %v817
        %v1721 = vmul.f32 %v821, %v821
        %1722 = vmatprep.subr.mxu0 0.0
        %1723 = vmatpush1.msra.mxu0 %v827
        %1724 = vmatprep.subr.mxu0 0.0
        %1725 = vmatpush1.msra.mxu0 %v828
        %1726 = vmatprep.subr.mxu0 0.0
        %1727 = vmatpush1.msra.mxu0 %v829
        %1728 = vmatprep.subr.mxu0 0.0
        %1729 = vmatpush1.msra.mxu0 %v830
        %1730 = vmatprep.subr.mxu0 0.0
        %1731 = vmatpush1.msra.mxu0 %v831
        %1732 = vmatprep.subr.mxu0 0.0
        %1733 = vmatpush1.msra.mxu0 %v832
        %1734 = vmatprep.subr.mxu0 0.0
        %1735 = vmatpush1.msra.mxu0 %v833
        %1736 = vmatprep.subr.mxu0 0.0
        %1737 = vmatpush1.msra.mxu0 %v834
        %1738 = vmatprep.subr.mxu0 0.0
        %1739 = vmatpush1.msra.mxu0 %v835
        %1740 = vmatprep.subr.mxu0 0.0
        %1741 = vmatpush1.msra.mxu0 %v836
        %1742 = vmatprep.subr.mxu0 0.0
        %1743 = vmatpush1.msra.mxu0 %v837
        %1744 = vmatprep.subr.mxu0 0.0
        %1745 = vmatpush1.msra.mxu0 %v838
        %1746 = vmatprep.subr.mxu0 0.0
        %1747 = vmatpush1.msra.mxu0 %v839
        %1748 = vmatprep.subr.mxu0 0.0
        %1749 = vmatpush1.msra.mxu0 %v840
        %1750 = vmatprep.subr.mxu0 0.0
        %1751 = vmatpush1.msra.mxu0 %v841
        %1752 = vmatprep.subr.mxu0 0.0
        %1753 = vmatpush1.msra.mxu0 %v842
        %1754 = vmatprep.subr.mxu0 0.0
        %1755 = vmatpush1.msra.mxu0 0.0
        %1756 = vmatprep.subr.mxu0 0.0
        %1757 = vmatpush1.msra.mxu0 0.0
        %1758 = vmatprep.subr.mxu0 0.0
        %1759 = vmatpush1.msra.mxu0 0.0
        %1760 = vmatprep.subr.mxu0 0.0
        %1761 = vmatpush1.msra.mxu0 0.0
        %1762 = vmatprep.subr.mxu0 0.0
        %1763 = vmatpush1.msra.mxu0 0.0
        %1764 = vmatprep.subr.mxu0 0.0
        %1765 = vmatpush1.msra.mxu0 0.0
        %1766 = vmatprep.subr.mxu0 0.0
        %1767 = vmatpush1.msra.mxu0 0.0
        %1768 = vmatprep.subr.mxu0 0.0
        %1769 = vmatpush1.msra.mxu0 0.0
        %1770 = vmatprep.subr.mxu0 0.0
        %1771 = vmatpush1.msra.mxu0 0.0
        %1772 = vmatprep.subr.mxu0 0.0
        %1773 = vmatpush1.msra.mxu0 0.0
        %1774 = vmatprep.subr.mxu0 0.0
        %1775 = vmatpush1.msra.mxu0 0.0
        %1776 = vmatprep.subr.mxu0 0.0
        %1777 = vmatpush1.msra.mxu0 0.0
        %1778 = vmatprep.subr.mxu0 0.0
        %1779 = vmatpush1.msra.mxu0 0.0
        %1780 = vmatprep.subr.mxu0 0.0
        %1781 = vmatpush1.msra.mxu0 0.0
        %1782 = vmatprep.subr.mxu0 0.0
        %1783 = vmatpush1.msra.mxu0 0.0
        %1784 = vmatprep.subr.mxu0 0.0
        %1785 = vmatpush1.msra.mxu0 0.0
        %1786 = vmatprep.mubr.f32.mxu0 0.0
        %1787 = vmatmul.mubr.f32.gmra.mrb[0].mxu0 %v1690
        %v1788 = vpop.f32.mrb[0].mxu0
        %v1789 = vadd.f32 1e-05, %v1788
        %v1790 = vpop.f32.mrb[0].mxu0
        %1791 = vmatprep.mubr.f32.mxu0 0.0
        %1792 = vmatmul.mubr.f32.gmra.mrb[0].mxu0 %v1691
        %v1793 = vpop.f32.mrb[0].mxu0
        %v1794 = vadd.f32 1e-05, %v1793
        %v1795 = vpop.f32.mrb[0].mxu0
        %1796 = vmatprep.mubr.f32.mxu0 0.0
        %1797 = vmatmul.mubr.f32.gmra.mrb[0].mxu0 %v1692
        %v1798 = vpop.f32.mrb[0].mxu0
        %v1799 = vadd.f32 1e-05, %v1798
        %v1800 = vpop.f32.mrb[0].mxu0
        %1801 = vmatprep.mubr.f32.mxu0 0.0
        %1802 = vmatmul.mubr.f32.gmra.mrb[0].mxu0 %v1693
        %v1803 = vpop.f32.mrb[0].mxu0
        %v1804 = vadd.f32 1e-05, %v1803
        %v1805 = vpop.f32.mrb[0].mxu0
        %1806 = vmatprep.mubr.f32.mxu0 0.0
        %1807 = vmatmul.mubr.f32.gmra.mrb[0].mxu0 %v1694
        %v1808 = vpop.f32.mrb[0].mxu0
        %v1809 = vadd.f32 1e-05, %v1808
        %v1810 = vpop.f32.mrb[0].mxu0
        %1811 = vmatprep.mubr.f32.mxu0 0.0
        %1812 = vmatmul.mubr.f32.gmra.mrb[0].mxu0 %v1695
        %v1813 = vpop.f32.mrb[0].mxu0
        %v1814 = vadd.f32 1e-05, %v1813
        %v1815 = vpop.f32.mrb[0].mxu0
        %1816 = vmatprep.mubr.f32.mxu0 0.0
        %1817 = vmatmul.mubr.f32.gmra.mrb[0].mxu0 %v1696
        %v1818 = vpop.f32.mrb[0].mxu0
        %v1819 = vadd.f32 1e-05, %v1818
        %v1820 = vpop.f32.mrb[0].mxu0
        %1821 = vmatprep.mubr.f32.mxu0 0.0
        %1822 = vmatmul.mubr.f32.gmra.mrb[0].mxu0 %v1697
        %v1823 = vpop.f32.mrb[0].mxu0
        %v1824 = vadd.f32 1e-05, %v1823
        %v1825 = vpop.f32.mrb[0].mxu0
        %1826 = vmatprep.mubr.f32.mxu0 0.0
        %1827 = vmatmul.mubr.f32.gmra.mrb[0].mxu0 %v1698
        %v1828 = vpop.f32.mrb[0].mxu0
        %v1829 = vadd.f32 1e-05, %v1828
        %v1830 = vpop.f32.mrb[0].mxu0
        %1831 = vmatprep.mubr.f32.mxu0 0.0
        %1832 = vmatmul.mubr.f32.gmra.mrb[0].mxu0 %v1699
        %v1833 = vpop.f32.mrb[0].mxu0
        %v1834 = vadd.f32 1e-05, %v1833
        %v1835 = vpop.f32.mrb[0].mxu0
        %1836 = vmatprep.mubr.f32.mxu0 0.0
        %1837 = vmatmul.mubr.f32.gmra.mrb[0].mxu0 %v1700
        %v1838 = vpop.f32.mrb[0].mxu0
        %v1839 = vadd.f32 1e-05, %v1838
        %v1840 = vpop.f32.mrb[0].mxu0
        %1841 = vmatprep.mubr.f32.mxu0 0.0
        %1842 = vmatmul.mubr.f32.gmra.mrb[0].mxu0 %v1701
        %v1843 = vpop.f32.mrb[0].mxu0
        %v1844 = vadd.f32 1e-05, %v1843
        %v1845 = vpop.f32.mrb[0].mxu0
        %1846 = vmatprep.mubr.f32.mxu0 0.0
        %1847 = vmatmul.mubr.f32.gmra.mrb[0].mxu0 %v1702
        %v1848 = vpop.f32.mrb[0].mxu0
        %v1849 = vadd.f32 1e-05, %v1848
        %v1850 = vpop.f32.mrb[0].mxu0
        %1851 = vmatprep.mubr.f32.mxu0 0.0
        %1852 = vmatmul.mubr.f32.gmra.mrb[0].mxu0 %v1703
        %v1853 = vpop.f32.mrb[0].mxu0
        %v1854 = vadd.f32 1e-05, %v1853
        %v1855 = vpop.f32.mrb[0].mxu0
        %1856 = vmatprep.mubr.f32.mxu0 0.0
        %1857 = vmatmul.mubr.f32.gmra.mrb[0].mxu0 %v1704
        %v1858 = vpop.f32.mrb[0].mxu0
        %v1859 = vadd.f32 1e-05, %v1858
        %v1860 = vpop.f32.mrb[0].mxu0
        %1861 = vmatprep.mubr.f32.mxu0 0.0
        %1862 = vmatmul.mubr.f32.gmra.mrb[0].mxu0 %v1705
        %v1863 = vpop.f32.mrb[0].mxu0
        %v1864 = vadd.f32 1e-05, %v1863
        %v1865 = vpop.f32.mrb[0].mxu0
        %1866 = vmatprep.mubr.f32.mxu0 0.0
        %1867 = vmatmul.mubr.f32.gmra.mrb[0].mxu0 %v1706
        %v1868 = vpop.f32.mrb[0].mxu0
        %v1869 = vadd.f32 1e-05, %v1868
        %v1870 = vpop.f32.mrb[0].mxu0
        %1871 = vmatprep.mubr.f32.mxu0 0.0
        %1872 = vmatmul.mubr.f32.gmra.mrb[0].mxu0 %v1707
        %v1873 = vpop.f32.mrb[0].mxu0
        %v1874 = vadd.f32 1e-05, %v1873
        %v1875 = vpop.f32.mrb[0].mxu0
        %1876 = vmatprep.mubr.f32.mxu0 0.0
        %1877 = vmatmul.mubr.f32.gmra.mrb[0].mxu0 %v1708
        %v1878 = vpop.f32.mrb[0].mxu0
        %v1879 = vadd.f32 1e-05, %v1878
        %v1880 = vpop.f32.mrb[0].mxu0
        %1881 = vmatprep.mubr.f32.mxu0 0.0
        %1882 = vmatmul.mubr.f32.gmra.mrb[0].mxu0 %v1709
        %v1883 = vpop.f32.mrb[0].mxu0
        %v1884 = vadd.f32 1e-05, %v1883
        %v1885 = vpop.f32.mrb[0].mxu0
        %1886 = vmatprep.mubr.f32.mxu0 0.0
        %1887 = vmatmul.mubr.f32.gmra.mrb[0].mxu0 %v1710
        %v1888 = vpop.f32.mrb[0].mxu0
        %v1889 = vadd.f32 1e-05, %v1888
        %v1890 = vpop.f32.mrb[0].mxu0
        %1891 = vmatprep.mubr.f32.mxu0 0.0
        %1892 = vmatmul.mubr.f32.gmra.mrb[0].mxu0 %v1711
        %v1893 = vpop.f32.mrb[0].mxu0
        %v1894 = vadd.f32 1e-05, %v1893
        %v1895 = vpop.f32.mrb[0].mxu0
        %1896 = vmatprep.mubr.f32.mxu0 0.0
        %1897 = vmatmul.mubr.f32.gmra.mrb[0].mxu0 %v1712
        %v1898 = vpop.f32.mrb[0].mxu0
        %v1899 = vadd.f32 1e-05, %v1898
        %v1900 = vpop.f32.mrb[0].mxu0
        %1901 = vmatprep.mubr.f32.mxu0 0.0
        %1902 = vmatmul.mubr.f32.gmra.mrb[0].mxu0 %v1713
        %v1903 = vpop.f32.mrb[0].mxu0
        %v1904 = vadd.f32 1e-05, %v1903
        %v1905 = vpop.f32.mrb[0].mxu0
        %1906 = vmatprep.mubr.f32.mxu0 0.0
        %1907 = vmatmul.mubr.f32.gmra.mrb[0].mxu0 %v1714
        %v1908 = vpop.f32.mrb[0].mxu0
        %v1909 = vadd.f32 1e-05, %v1908
        %v1910 = vpop.f32.mrb[0].mxu0
        %1911 = vmatprep.mubr.f32.mxu0 0.0
        %1912 = vmatmul.mubr.f32.gmra.mrb[0].mxu0 %v1715
        %v1913 = vpop.f32.mrb[0].mxu0
        %v1914 = vadd.f32 1e-05, %v1913
        %v1915 = vpop.f32.mrb[0].mxu0
        %1916 = vmatprep.mubr.f32.mxu0 0.0
        %1917 = vmatmul.mubr.f32.gmra.mrb[0].mxu0 %v1716
        %v1918 = vpop.f32.mrb[0].mxu0
        %v1919 = vadd.f32 1e-05, %v1918
        %v1920 = vpop.f32.mrb[0].mxu0
        %1921 = vmatprep.mubr.f32.mxu0 0.0
        %1922 = vmatmul.mubr.f32.gmra.mrb[0].mxu0 %v1717
        %v1923 = vpop.f32.mrb[0].mxu0
        %v1924 = vadd.f32 1e-05, %v1923
        %v1925 = vpop.f32.mrb[0].mxu0
        %1926 = vmatprep.mubr.f32.mxu0 0.0
        %1927 = vmatmul.mubr.f32.gmra.mrb[0].mxu0 %v1718
        %v1928 = vpop.f32.mrb[0].mxu0
        %v1929 = vadd.f32 1e-05, %v1928
        %v1930 = vpop.f32.mrb[0].mxu0
        %1931 = vmatprep.mubr.f32.mxu0 0.0
        %1932 = vmatmul.mubr.f32.gmra.mrb[0].mxu0 %v1719
        %v1933 = vpop.f32.mrb[0].mxu0
        %v1934 = vadd.f32 1e-05, %v1933
        %v1935 = vpop.f32.mrb[0].mxu0
        %1936 = vmatprep.mubr.f32.mxu0 0.0
        %1937 = vmatmul.mubr.f32.gmra.mrb[0].mxu0 %v1720
        %v1938 = vpop.f32.mrb[0].mxu0
        %v1939 = vadd.f32 1e-05, %v1938
        %v1940 = vpop.f32.mrb[0].mxu0
        %1941 = vmatprep.mubr.f32.mxu0 0.0
        %1942 = vmatmul.mubr.f32.gmra.mrb[0].mxu0 %v1721
        %v1943 = vpop.f32.mrb[0].mxu0
        %v1944 = vadd.f32 1e-05, %v1943
        %v1945 = vpop.f32.mrb[0].mxu0
        %1946 = vdwg.mxu0
        %v1947 = vrsqrt.pop %v1789
        %v1948 = vrsqrt.pop %v1794
        %v1949 = vrsqrt.pop %v1799
        %v1950 = vrsqrt.pop %v1804
        %v1951 = vrsqrt.pop %v1809
        %v1952 = vrsqrt.pop %v1814
        %v1953 = vrsqrt.pop %v1819
        %v1954 = vrsqrt.pop %v1824
        %v1955 = vrsqrt.pop %v1829
        %v1956 = vrsqrt.pop %v1834
        %v1957 = vrsqrt.pop %v1839
        %v1958 = vrsqrt.pop %v1844
        %v1959 = vrsqrt.pop %v1849
        %v1960 = vrsqrt.pop %v1854
        %v1961 = vrsqrt.pop %v1859
        %v1962 = vrsqrt.pop %v1864
        %v1963 = vrsqrt.pop %v1869
        %v1964 = vrsqrt.pop %v1874
        %v1965 = vrsqrt.pop %v1879
        %v1966 = vrsqrt.pop %v1884
        %v1967 = vrsqrt.pop %v1889
        %v1968 = vrsqrt.pop %v1894
        %v1969 = vrsqrt.pop %v1899
        %v1970 = vrsqrt.pop %v1904
        %v1971 = vrsqrt.pop %v1909
        %v1972 = vrsqrt.pop %v1914
        %v1973 = vrsqrt.pop %v1919
        %v1974 = vrsqrt.pop %v1924
        %v1975 = vrsqrt.pop %v1929
        %v1976 = vrsqrt.pop %v1934
        %v1977 = vrsqrt.pop %v1939
        %v1978 = vrsqrt.pop %v1944
        %v1979 = vmul.f32 %v667, %v1947
        %v1980 = vmul.f32 %v671, %v1948
        %v1981 = vmul.f32 %v677, %v1949
        %v1982 = vmul.f32 %v681, %v1950
        %v1983 = vmul.f32 %v687, %v1951
        %v1984 = vmul.f32 %v691, %v1952
        %v1985 = vmul.f32 %v697, %v1953
        %v1986 = vmul.f32 %v701, %v1954
        %v1987 = vmul.f32 %v707, %v1955
        %v1988 = vmul.f32 %v711, %v1956
        %v1989 = vmul.f32 %v717, %v1957
        %v1990 = vmul.f32 %v721, %v1958
        %v1991 = vmul.f32 %v727, %v1959
        %v1992 = vmul.f32 %v731, %v1960
        %v1993 = vmul.f32 %v737, %v1961
        %v1994 = vmul.f32 %v741, %v1962
        %v1995 = vmul.f32 %v747, %v1963
        %v1996 = vmul.f32 %v751, %v1964
        %v1997 = vmul.f32 %v757, %v1965
        %v1998 = vmul.f32 %v761, %v1966
        %v1999 = vmul.f32 %v767, %v1967
        %v2000 = vmul.f32 %v771, %v1968
        %v2001 = vmul.f32 %v777, %v1969
        %v2002 = vmul.f32 %v781, %v1970
        %v2003 = vmul.f32 %v787, %v1971
        %v2004 = vmul.f32 %v791, %v1972
        %v2005 = vmul.f32 %v797, %v1973
        %v2006 = vmul.f32 %v801, %v1974
        %v2007 = vmul.f32 %v807, %v1975
        %v2008 = vmul.f32 %v811, %v1976
        %v2009 = vmul.f32 %v817, %v1977
        %v2010 = vmul.f32 %v821, %v1978
        %v2011 = vmul.f32 %v1979, %v1168
        %v2012 = vmul.f32 %v1980, %v1168
        %v2013 = vmul.f32 %v1981, %v1168
        %v2014 = vmul.f32 %v1982, %v1168
        %v2015 = vmul.f32 %v1983, %v1168
        %v2016 = vmul.f32 %v1984, %v1168
        %v2017 = vmul.f32 %v1985, %v1168
        %v2018 = vmul.f32 %v1986, %v1168
        %v2019 = vmul.f32 %v1987, %v1168
        %v2020 = vmul.f32 %v1988, %v1168
        %v2021 = vmul.f32 %v1989, %v1168
        %v2022 = vmul.f32 %v1990, %v1168
        %v2023 = vmul.f32 %v1991, %v1168
        %v2024 = vmul.f32 %v1992, %v1168
        %v2025 = vmul.f32 %v1993, %v1168
        %v2026 = vmul.f32 %v1994, %v1168
        %v2027 = vmul.f32 %v1995, %v1168
        %v2028 = vmul.f32 %v1996, %v1168
        %v2029 = vmul.f32 %v1997, %v1168
        %v2030 = vmul.f32 %v1998, %v1168
        %v2031 = vmul.f32 %v1999, %v1168
        %v2032 = vmul.f32 %v2000, %v1168
        %v2033 = vmul.f32 %v2001, %v1168
        %v2034 = vmul.f32 %v2002, %v1168
        %v2035 = vmul.f32 %v2003, %v1168
        %v2036 = vmul.f32 %v2004, %v1168
        %v2037 = vmul.f32 %v2005, %v1168
        %v2038 = vmul.f32 %v2006, %v1168
        %v2039 = vmul.f32 %v2007, %v1168
        %v2040 = vmul.f32 %v2008, %v1168
        %v2041 = vmul.f32 %v2009, %v1168
        %v2042 = vmul.f32 %v2010, %v1168
        %v2043 = vadd.f32 %v2011, %v1206
        %v2044 = vadd.f32 %v2012, %v1206
        %v2045 = vadd.f32 %v2013, %v1206
        %v2046 = vadd.f32 %v2014, %v1206
        %v2047 = vadd.f32 %v2015, %v1206
        %v2048 = vadd.f32 %v2016, %v1206
        %v2049 = vadd.f32 %v2017, %v1206
        %v2050 = vadd.f32 %v2018, %v1206
        %v2051 = vadd.f32 %v2019, %v1206
        %v2052 = vadd.f32 %v2020, %v1206
        %v2053 = vadd.f32 %v2021, %v1206
        %v2054 = vadd.f32 %v2022, %v1206
        %v2055 = vadd.f32 %v2023, %v1206
        %v2056 = vadd.f32 %v2024, %v1206
        %v2057 = vadd.f32 %v2025, %v1206
        %v2058 = vadd.f32 %v2026, %v1206
        %v2059 = vadd.f32 %v2027, %v1206
        %v2060 = vadd.f32 %v2028, %v1206
        %v2061 = vadd.f32 %v2029, %v1206
        %v2062 = vadd.f32 %v2030, %v1206
        %v2063 = vadd.f32 %v2031, %v1206
        %v2064 = vadd.f32 %v2032, %v1206
        %v2065 = vadd.f32 %v2033, %v1206
        %v2066 = vadd.f32 %v2034, %v1206
        %v2067 = vadd.f32 %v2035, %v1206
        %v2068 = vadd.f32 %v2036, %v1206
        %v2069 = vadd.f32 %v2037, %v1206
        %v2070 = vadd.f32 %v2038, %v1206
        %v2071 = vadd.f32 %v2039, %v1206
        %v2072 = vadd.f32 %v2040, %v1206
        %v2073 = vadd.f32 %v2041, %v1206
        %v2074 = vadd.f32 %v2042, %v1206
        %s2075 = scalar_lea.vmem %s290, 32 [#allocation8]
        %2076 = vst [vmem:[%s2075] sm:$0xff] %v2043
        %2077 = vst [vmem:[%s2075 + $0x8] sm:$0xff] %v2044
        %2078 = vst [vmem:[%s2075 + $0x40] sm:$0xff] %v2045
        %2079 = vst [vmem:[%s2075 + $0x48] sm:$0xff] %v2046
        %2080 = vst [vmem:[%s2075 + $0x80] sm:$0xff] %v2047
        %2081 = vst [vmem:[%s2075 + $0x88] sm:$0xff] %v2048
        %2082 = vst [vmem:[%s2075 + $0xc0] sm:$0xff] %v2049
        %2083 = vst [vmem:[%s2075 + $0xc8] sm:$0xff] %v2050
        %2084 = vst [vmem:[%s2075 + $0x100] sm:$0xff] %v2051
        %2085 = vst [vmem:[%s2075 + $0x108] sm:$0xff] %v2052
        %2086 = vst [vmem:[%s2075 + $0x140] sm:$0xff] %v2053
        %2087 = vst [vmem:[%s2075 + $0x148] sm:$0xff] %v2054
        %2088 = vst [vmem:[%s2075 + $0x180] sm:$0xff] %v2055
        %2089 = vst [vmem:[%s2075 + $0x188] sm:$0xff] %v2056
        %2090 = vst [vmem:[%s2075 + $0x1c0] sm:$0xff] %v2057
        %2091 = vst [vmem:[%s2075 + $0x1c8] sm:$0xff] %v2058
        %2092 = vst [vmem:[%s2075 + $0x200] sm:$0xff] %v2059
        %2093 = vst [vmem:[%s2075 + $0x208] sm:$0xff] %v2060
        %2094 = vst [vmem:[%s2075 + $0x240] sm:$0xff] %v2061
        %2095 = vst [vmem:[%s2075 + $0x248] sm:$0xff] %v2062
        %2096 = vst [vmem:[%s2075 + $0x280] sm:$0xff] %v2063
        %2097 = vst [vmem:[%s2075 + $0x288] sm:$0xff] %v2064
        %2098 = vst [vmem:[%s2075 + $0x2c0] sm:$0xff] %v2065
        %2099 = vst [vmem:[%s2075 + $0x2c8] sm:$0xff] %v2066
        %2100 = vst [vmem:[%s2075 + $0x300] sm:$0xff] %v2067
        %2101 = vst [vmem:[%s2075 + $0x308] sm:$0xff] %v2068
        %2102 = vst [vmem:[%s2075 + $0x340] sm:$0xff] %v2069
        %2103 = vst [vmem:[%s2075 + $0x348] sm:$0xff] %v2070
        %2104 = vst [vmem:[%s2075 + $0x380] sm:$0xff] %v2071
        %2105 = vst [vmem:[%s2075 + $0x388] sm:$0xff] %v2072
        %2106 = vst [vmem:[%s2075 + $0x3c0] sm:$0xff] %v2073
        %2107 = vst [vmem:[%s2075 + $0x3c8] sm:$0xff] %v2074
        %v2108 = vmul.f32 %v669, %v669
        %v2109 = vmul.f32 %v673, %v673
        %v2110 = vmul.f32 %v679, %v679
        %v2111 = vmul.f32 %v683, %v683
        %v2112 = vmul.f32 %v689, %v689
        %v2113 = vmul.f32 %v693, %v693
        %v2114 = vmul.f32 %v699, %v699
        %v2115 = vmul.f32 %v703, %v703
        %v2116 = vmul.f32 %v709, %v709
        %v2117 = vmul.f32 %v713, %v713
        %v2118 = vmul.f32 %v719, %v719
        %v2119 = vmul.f32 %v723, %v723
        %v2120 = vmul.f32 %v729, %v729
        %v2121 = vmul.f32 %v733, %v733
        %v2122 = vmul.f32 %v739, %v739
        %v2123 = vmul.f32 %v743, %v743
        %v2124 = vmul.f32 %v749, %v749
        %v2125 = vmul.f32 %v753, %v753
        %v2126 = vmul.f32 %v759, %v759
        %v2127 = vmul.f32 %v763, %v763
        %v2128 = vmul.f32 %v769, %v769
        %v2129 = vmul.f32 %v773, %v773
        %v2130 = vmul.f32 %v779, %v779
        %v2131 = vmul.f32 %v783, %v783
        %v2132 = vmul.f32 %v789, %v789
        %v2133 = vmul.f32 %v793, %v793
        %v2134 = vmul.f32 %v799, %v799
        %v2135 = vmul.f32 %v803, %v803
        %v2136 = vmul.f32 %v809, %v809
        %v2137 = vmul.f32 %v813, %v813
        %v2138 = vmul.f32 %v819, %v819
        %v2139 = vmul.f32 %v823, %v823
        %2140 = vmatprep.subr.mxu0 0.0
        %2141 = vmatpush1.msra.mxu0 %v827
        %2142 = vmatprep.subr.mxu0 0.0
        %2143 = vmatpush1.msra.mxu0 %v828
        %2144 = vmatprep.subr.mxu0 0.0
        %2145 = vmatpush1.msra.mxu0 %v829
        %2146 = vmatprep.subr.mxu0 0.0
        %2147 = vmatpush1.msra.mxu0 %v830
        %2148 = vmatprep.subr.mxu0 0.0
        %2149 = vmatpush1.msra.mxu0 %v831
        %2150 = vmatprep.subr.mxu0 0.0
        %2151 = vmatpush1.msra.mxu0 %v832
        %2152 = vmatprep.subr.mxu0 0.0
        %2153 = vmatpush1.msra.mxu0 %v833
        %2154 = vmatprep.subr.mxu0 0.0
        %2155 = vmatpush1.msra.mxu0 %v834
        %2156 = vmatprep.subr.mxu0 0.0
        %2157 = vmatpush1.msra.mxu0 %v835
        %2158 = vmatprep.subr.mxu0 0.0
        %2159 = vmatpush1.msra.mxu0 %v836
        %2160 = vmatprep.subr.mxu0 0.0
        %2161 = vmatpush1.msra.mxu0 %v837
        %2162 = vmatprep.subr.mxu0 0.0
        %2163 = vmatpush1.msra.mxu0 %v838
        %2164 = vmatprep.subr.mxu0 0.0
        %2165 = vmatpush1.msra.mxu0 %v839
        %2166 = vmatprep.subr.mxu0 0.0
        %2167 = vmatpush1.msra.mxu0 %v840
        %2168 = vmatprep.subr.mxu0 0.0
        %2169 = vmatpush1.msra.mxu0 %v841
        %2170 = vmatprep.subr.mxu0 0.0
        %2171 = vmatpush1.msra.mxu0 %v842
        %2172 = vmatprep.subr.mxu0 0.0
        %2173 = vmatpush1.msra.mxu0 0.0
        %2174 = vmatprep.subr.mxu0 0.0
        %2175 = vmatpush1.msra.mxu0 0.0
        %2176 = vmatprep.subr.mxu0 0.0
        %2177 = vmatpush1.msra.mxu0 0.0
        %2178 = vmatprep.subr.mxu0 0.0
        %2179 = vmatpush1.msra.mxu0 0.0
        %2180 = vmatprep.subr.mxu0 0.0
        %2181 = vmatpush1.msra.mxu0 0.0
        %2182 = vmatprep.subr.mxu0 0.0
        %2183 = vmatpush1.msra.mxu0 0.0
        %2184 = vmatprep.subr.mxu0 0.0
        %2185 = vmatpush1.msra.mxu0 0.0
        %2186 = vmatprep.subr.mxu0 0.0
        %2187 = vmatpush1.msra.mxu0 0.0
        %2188 = vmatprep.subr.mxu0 0.0
        %2189 = vmatpush1.msra.mxu0 0.0
        %2190 = vmatprep.subr.mxu0 0.0
        %2191 = vmatpush1.msra.mxu0 0.0
        %2192 = vmatprep.subr.mxu0 0.0
        %2193 = vmatpush1.msra.mxu0 0.0
        %2194 = vmatprep.subr.mxu0 0.0
        %2195 = vmatpush1.msra.mxu0 0.0
        %2196 = vmatprep.subr.mxu0 0.0
        %2197 = vmatpush1.msra.mxu0 0.0
        %2198 = vmatprep.subr.mxu0 0.0
        %2199 = vmatpush1.msra.mxu0 0.0
        %2200 = vmatprep.subr.mxu0 0.0
        %2201 = vmatpush1.msra.mxu0 0.0
        %2202 = vmatprep.subr.mxu0 0.0
        %2203 = vmatpush1.msra.mxu0 0.0
        %2204 = vmatprep.mubr.f32.mxu0 0.0
        %2205 = vmatmul.mubr.f32.gmra.mrb[0].mxu0 %v2108
        %v2206 = vpop.f32.mrb[0].mxu0
        %v2207 = vadd.f32 1e-05, %v2206
        %v2208 = vpop.f32.mrb[0].mxu0
        %2209 = vmatprep.mubr.f32.mxu0 0.0
        %2210 = vmatmul.mubr.f32.gmra.mrb[0].mxu0 %v2109
        %v2211 = vpop.f32.mrb[0].mxu0
        %v2212 = vadd.f32 1e-05, %v2211
        %v2213 = vpop.f32.mrb[0].mxu0
        %2214 = vmatprep.mubr.f32.mxu0 0.0
        %2215 = vmatmul.mubr.f32.gmra.mrb[0].mxu0 %v2110
        %v2216 = vpop.f32.mrb[0].mxu0
        %v2217 = vadd.f32 1e-05, %v2216
        %v2218 = vpop.f32.mrb[0].mxu0
        %2219 = vmatprep.mubr.f32.mxu0 0.0
        %2220 = vmatmul.mubr.f32.gmra.mrb[0].mxu0 %v2111
        %v2221 = vpop.f32.mrb[0].mxu0
        %v2222 = vadd.f32 1e-05, %v2221
        %v2223 = vpop.f32.mrb[0].mxu0
        %2224 = vmatprep.mubr.f32.mxu0 0.0
        %2225 = vmatmul.mubr.f32.gmra.mrb[0].mxu0 %v2112
        %v2226 = vpop.f32.mrb[0].mxu0
        %v2227 = vadd.f32 1e-05, %v2226
        %v2228 = vpop.f32.mrb[0].mxu0
        %2229 = vmatprep.mubr.f32.mxu0 0.0
        %2230 = vmatmul.mubr.f32.gmra.mrb[0].mxu0 %v2113
        %v2231 = vpop.f32.mrb[0].mxu0
        %v2232 = vadd.f32 1e-05, %v2231
        %v2233 = vpop.f32.mrb[0].mxu0
        %2234 = vmatprep.mubr.f32.mxu0 0.0
        %2235 = vmatmul.mubr.f32.gmra.mrb[0].mxu0 %v2114
        %v2236 = vpop.f32.mrb[0].mxu0
        %v2237 = vadd.f32 1e-05, %v2236
        %v2238 = vpop.f32.mrb[0].mxu0
        %2239 = vmatprep.mubr.f32.mxu0 0.0
        %2240 = vmatmul.mubr.f32.gmra.mrb[0].mxu0 %v2115
        %v2241 = vpop.f32.mrb[0].mxu0
        %v2242 = vadd.f32 1e-05, %v2241
        %v2243 = vpop.f32.mrb[0].mxu0
        %2244 = vmatprep.mubr.f32.mxu0 0.0
        %2245 = vmatmul.mubr.f32.gmra.mrb[0].mxu0 %v2116
        %v2246 = vpop.f32.mrb[0].mxu0
        %v2247 = vadd.f32 1e-05, %v2246
        %v2248 = vpop.f32.mrb[0].mxu0
        %2249 = vmatprep.mubr.f32.mxu0 0.0
        %2250 = vmatmul.mubr.f32.gmra.mrb[0].mxu0 %v2117
        %v2251 = vpop.f32.mrb[0].mxu0
        %v2252 = vadd.f32 1e-05, %v2251
        %v2253 = vpop.f32.mrb[0].mxu0
        %2254 = vmatprep.mubr.f32.mxu0 0.0
        %2255 = vmatmul.mubr.f32.gmra.mrb[0].mxu0 %v2118
        %v2256 = vpop.f32.mrb[0].mxu0
        %v2257 = vadd.f32 1e-05, %v2256
        %v2258 = vpop.f32.mrb[0].mxu0
        %2259 = vmatprep.mubr.f32.mxu0 0.0
        %2260 = vmatmul.mubr.f32.gmra.mrb[0].mxu0 %v2119
        %v2261 = vpop.f32.mrb[0].mxu0
        %v2262 = vadd.f32 1e-05, %v2261
        %v2263 = vpop.f32.mrb[0].mxu0
        %2264 = vmatprep.mubr.f32.mxu0 0.0
        %2265 = vmatmul.mubr.f32.gmra.mrb[0].mxu0 %v2120
        %v2266 = vpop.f32.mrb[0].mxu0
        %v2267 = vadd.f32 1e-05, %v2266
        %v2268 = vpop.f32.mrb[0].mxu0
        %2269 = vmatprep.mubr.f32.mxu0 0.0
        %2270 = vmatmul.mubr.f32.gmra.mrb[0].mxu0 %v2121
        %v2271 = vpop.f32.mrb[0].mxu0
        %v2272 = vadd.f32 1e-05, %v2271
        %v2273 = vpop.f32.mrb[0].mxu0
        %2274 = vmatprep.mubr.f32.mxu0 0.0
        %2275 = vmatmul.mubr.f32.gmra.mrb[0].mxu0 %v2122
        %v2276 = vpop.f32.mrb[0].mxu0
        %v2277 = vadd.f32 1e-05, %v2276
        %v2278 = vpop.f32.mrb[0].mxu0
        %2279 = vmatprep.mubr.f32.mxu0 0.0
        %2280 = vmatmul.mubr.f32.gmra.mrb[0].mxu0 %v2123
        %v2281 = vpop.f32.mrb[0].mxu0
        %v2282 = vadd.f32 1e-05, %v2281
        %v2283 = vpop.f32.mrb[0].mxu0
        %2284 = vmatprep.mubr.f32.mxu0 0.0
        %2285 = vmatmul.mubr.f32.gmra.mrb[0].mxu0 %v2124
        %v2286 = vpop.f32.mrb[0].mxu0
        %v2287 = vadd.f32 1e-05, %v2286
        %v2288 = vpop.f32.mrb[0].mxu0
        %2289 = vmatprep.mubr.f32.mxu0 0.0
        %2290 = vmatmul.mubr.f32.gmra.mrb[0].mxu0 %v2125
        %v2291 = vpop.f32.mrb[0].mxu0
        %v2292 = vadd.f32 1e-05, %v2291
        %v2293 = vpop.f32.mrb[0].mxu0
        %2294 = vmatprep.mubr.f32.mxu0 0.0
        %2295 = vmatmul.mubr.f32.gmra.mrb[0].mxu0 %v2126
        %v2296 = vpop.f32.mrb[0].mxu0
        %v2297 = vadd.f32 1e-05, %v2296
        %v2298 = vpop.f32.mrb[0].mxu0
        %2299 = vmatprep.mubr.f32.mxu0 0.0
        %2300 = vmatmul.mubr.f32.gmra.mrb[0].mxu0 %v2127
        %v2301 = vpop.f32.mrb[0].mxu0
        %v2302 = vadd.f32 1e-05, %v2301
        %v2303 = vpop.f32.mrb[0].mxu0
        %2304 = vmatprep.mubr.f32.mxu0 0.0
        %2305 = vmatmul.mubr.f32.gmra.mrb[0].mxu0 %v2128
        %v2306 = vpop.f32.mrb[0].mxu0
        %v2307 = vadd.f32 1e-05, %v2306
        %v2308 = vpop.f32.mrb[0].mxu0
        %2309 = vmatprep.mubr.f32.mxu0 0.0
        %2310 = vmatmul.mubr.f32.gmra.mrb[0].mxu0 %v2129
        %v2311 = vpop.f32.mrb[0].mxu0
        %v2312 = vadd.f32 1e-05, %v2311
        %v2313 = vpop.f32.mrb[0].mxu0
        %2314 = vmatprep.mubr.f32.mxu0 0.0
        %2315 = vmatmul.mubr.f32.gmra.mrb[0].mxu0 %v2130
        %v2316 = vpop.f32.mrb[0].mxu0
        %v2317 = vadd.f32 1e-05, %v2316
        %v2318 = vpop.f32.mrb[0].mxu0
        %2319 = vmatprep.mubr.f32.mxu0 0.0
        %2320 = vmatmul.mubr.f32.gmra.mrb[0].mxu0 %v2131
        %v2321 = vpop.f32.mrb[0].mxu0
        %v2322 = vadd.f32 1e-05, %v2321
        %v2323 = vpop.f32.mrb[0].mxu0
        %2324 = vmatprep.mubr.f32.mxu0 0.0
        %2325 = vmatmul.mubr.f32.gmra.mrb[0].mxu0 %v2132
        %v2326 = vpop.f32.mrb[0].mxu0
        %v2327 = vadd.f32 1e-05, %v2326
        %v2328 = vpop.f32.mrb[0].mxu0
        %2329 = vmatprep.mubr.f32.mxu0 0.0
        %2330 = vmatmul.mubr.f32.gmra.mrb[0].mxu0 %v2133
        %v2331 = vpop.f32.mrb[0].mxu0
        %v2332 = vadd.f32 1e-05, %v2331
        %v2333 = vpop.f32.mrb[0].mxu0
        %2334 = vmatprep.mubr.f32.mxu0 0.0
        %2335 = vmatmul.mubr.f32.gmra.mrb[0].mxu0 %v2134
        %v2336 = vpop.f32.mrb[0].mxu0
        %v2337 = vadd.f32 1e-05, %v2336
        %v2338 = vpop.f32.mrb[0].mxu0
        %2339 = vmatprep.mubr.f32.mxu0 0.0
        %2340 = vmatmul.mubr.f32.gmra.mrb[0].mxu0 %v2135
        %v2341 = vpop.f32.mrb[0].mxu0
        %v2342 = vadd.f32 1e-05, %v2341
        %v2343 = vpop.f32.mrb[0].mxu0
        %2344 = vmatprep.mubr.f32.mxu0 0.0
        %2345 = vmatmul.mubr.f32.gmra.mrb[0].mxu0 %v2136
        %v2346 = vpop.f32.mrb[0].mxu0
        %v2347 = vadd.f32 1e-05, %v2346
        %v2348 = vpop.f32.mrb[0].mxu0
        %2349 = vmatprep.mubr.f32.mxu0 0.0
        %2350 = vmatmul.mubr.f32.gmra.mrb[0].mxu0 %v2137
        %v2351 = vpop.f32.mrb[0].mxu0
        %v2352 = vadd.f32 1e-05, %v2351
        %v2353 = vpop.f32.mrb[0].mxu0
        %2354 = vmatprep.mubr.f32.mxu0 0.0
        %2355 = vmatmul.mubr.f32.gmra.mrb[0].mxu0 %v2138
        %v2356 = vpop.f32.mrb[0].mxu0
        %v2357 = vadd.f32 1e-05, %v2356
        %v2358 = vpop.f32.mrb[0].mxu0
        %2359 = vmatprep.mubr.f32.mxu0 0.0
        %2360 = vmatmul.mubr.f32.gmra.mrb[0].mxu0 %v2139
        %v2361 = vpop.f32.mrb[0].mxu0
        %v2362 = vadd.f32 1e-05, %v2361
        %v2363 = vpop.f32.mrb[0].mxu0
        %2364 = vdwg.mxu0
        %v2365 = vrsqrt.pop %v2207
        %v2366 = vrsqrt.pop %v2212
        %v2367 = vrsqrt.pop %v2217
        %v2368 = vrsqrt.pop %v2222
        %v2369 = vrsqrt.pop %v2227
        %v2370 = vrsqrt.pop %v2232
        %v2371 = vrsqrt.pop %v2237
        %v2372 = vrsqrt.pop %v2242
        %v2373 = vrsqrt.pop %v2247
        %v2374 = vrsqrt.pop %v2252
        %v2375 = vrsqrt.pop %v2257
        %v2376 = vrsqrt.pop %v2262
        %v2377 = vrsqrt.pop %v2267
        %v2378 = vrsqrt.pop %v2272
        %v2379 = vrsqrt.pop %v2277
        %v2380 = vrsqrt.pop %v2282
        %v2381 = vrsqrt.pop %v2287
        %v2382 = vrsqrt.pop %v2292
        %v2383 = vrsqrt.pop %v2297
        %v2384 = vrsqrt.pop %v2302
        %v2385 = vrsqrt.pop %v2307
        %v2386 = vrsqrt.pop %v2312
        %v2387 = vrsqrt.pop %v2317
        %v2388 = vrsqrt.pop %v2322
        %v2389 = vrsqrt.pop %v2327
        %v2390 = vrsqrt.pop %v2332
        %v2391 = vrsqrt.pop %v2337
        %v2392 = vrsqrt.pop %v2342
        %v2393 = vrsqrt.pop %v2347
        %v2394 = vrsqrt.pop %v2352
        %v2395 = vrsqrt.pop %v2357
        %v2396 = vrsqrt.pop %v2362
        %v2397 = vmul.f32 %v669, %v2365
        %v2398 = vmul.f32 %v673, %v2366
        %v2399 = vmul.f32 %v679, %v2367
        %v2400 = vmul.f32 %v683, %v2368
        %v2401 = vmul.f32 %v689, %v2369
        %v2402 = vmul.f32 %v693, %v2370
        %v2403 = vmul.f32 %v699, %v2371
        %v2404 = vmul.f32 %v703, %v2372
        %v2405 = vmul.f32 %v709, %v2373
        %v2406 = vmul.f32 %v713, %v2374
        %v2407 = vmul.f32 %v719, %v2375
        %v2408 = vmul.f32 %v723, %v2376
        %v2409 = vmul.f32 %v729, %v2377
        %v2410 = vmul.f32 %v733, %v2378
        %v2411 = vmul.f32 %v739, %v2379
        %v2412 = vmul.f32 %v743, %v2380
        %v2413 = vmul.f32 %v749, %v2381
        %v2414 = vmul.f32 %v753, %v2382
        %v2415 = vmul.f32 %v759, %v2383
        %v2416 = vmul.f32 %v763, %v2384
        %v2417 = vmul.f32 %v769, %v2385
        %v2418 = vmul.f32 %v773, %v2386
        %v2419 = vmul.f32 %v779, %v2387
        %v2420 = vmul.f32 %v783, %v2388
        %v2421 = vmul.f32 %v789, %v2389
        %v2422 = vmul.f32 %v793, %v2390
        %v2423 = vmul.f32 %v799, %v2391
        %v2424 = vmul.f32 %v803, %v2392
        %v2425 = vmul.f32 %v809, %v2393
        %v2426 = vmul.f32 %v813, %v2394
        %v2427 = vmul.f32 %v819, %v2395
        %v2428 = vmul.f32 %v823, %v2396
        %v2429 = vmul.f32 %v2397, %v1168
        %v2430 = vmul.f32 %v2398, %v1168
        %v2431 = vmul.f32 %v2399, %v1168
        %v2432 = vmul.f32 %v2400, %v1168
        %v2433 = vmul.f32 %v2401, %v1168
        %v2434 = vmul.f32 %v2402, %v1168
        %v2435 = vmul.f32 %v2403, %v1168
        %v2436 = vmul.f32 %v2404, %v1168
        %v2437 = vmul.f32 %v2405, %v1168
        %v2438 = vmul.f32 %v2406, %v1168
        %v2439 = vmul.f32 %v2407, %v1168
        %v2440 = vmul.f32 %v2408, %v1168
        %v2441 = vmul.f32 %v2409, %v1168
        %v2442 = vmul.f32 %v2410, %v1168
        %v2443 = vmul.f32 %v2411, %v1168
        %v2444 = vmul.f32 %v2412, %v1168
        %v2445 = vmul.f32 %v2413, %v1168
        %v2446 = vmul.f32 %v2414, %v1168
        %v2447 = vmul.f32 %v2415, %v1168
        %v2448 = vmul.f32 %v2416, %v1168
        %v2449 = vmul.f32 %v2417, %v1168
        %v2450 = vmul.f32 %v2418, %v1168
        %v2451 = vmul.f32 %v2419, %v1168
        %v2452 = vmul.f32 %v2420, %v1168
        %v2453 = vmul.f32 %v2421, %v1168
        %v2454 = vmul.f32 %v2422, %v1168
        %v2455 = vmul.f32 %v2423, %v1168
        %v2456 = vmul.f32 %v2424, %v1168
        %v2457 = vmul.f32 %v2425, %v1168
        %v2458 = vmul.f32 %v2426, %v1168
        %v2459 = vmul.f32 %v2427, %v1168
        %v2460 = vmul.f32 %v2428, %v1168
        %v2461 = vadd.f32 %v2429, %v1206
        %v2462 = vadd.f32 %v2430, %v1206
        %v2463 = vadd.f32 %v2431, %v1206
        %v2464 = vadd.f32 %v2432, %v1206
        %v2465 = vadd.f32 %v2433, %v1206
        %v2466 = vadd.f32 %v2434, %v1206
        %v2467 = vadd.f32 %v2435, %v1206
        %v2468 = vadd.f32 %v2436, %v1206
        %v2469 = vadd.f32 %v2437, %v1206
        %v2470 = vadd.f32 %v2438, %v1206
        %v2471 = vadd.f32 %v2439, %v1206
        %v2472 = vadd.f32 %v2440, %v1206
        %v2473 = vadd.f32 %v2441, %v1206
        %v2474 = vadd.f32 %v2442, %v1206
        %v2475 = vadd.f32 %v2443, %v1206
        %v2476 = vadd.f32 %v2444, %v1206
        %v2477 = vadd.f32 %v2445, %v1206
        %v2478 = vadd.f32 %v2446, %v1206
        %v2479 = vadd.f32 %v2447, %v1206
        %v2480 = vadd.f32 %v2448, %v1206
        %v2481 = vadd.f32 %v2449, %v1206
        %v2482 = vadd.f32 %v2450, %v1206
        %v2483 = vadd.f32 %v2451, %v1206
        %v2484 = vadd.f32 %v2452, %v1206
        %v2485 = vadd.f32 %v2453, %v1206
        %v2486 = vadd.f32 %v2454, %v1206
        %v2487 = vadd.f32 %v2455, %v1206
        %v2488 = vadd.f32 %v2456, %v1206
        %v2489 = vadd.f32 %v2457, %v1206
        %v2490 = vadd.f32 %v2458, %v1206
        %v2491 = vadd.f32 %v2459, %v1206
        %v2492 = vadd.f32 %v2460, %v1206
        %s2493 = scalar_lea.vmem %s290, 48 [#allocation8]
        %2494 = vst [vmem:[%s2493] sm:$0xff] %v2461
        %2495 = vst [vmem:[%s2493 + $0x8] sm:$0xff] %v2462
        %2496 = vst [vmem:[%s2493 + $0x40] sm:$0xff] %v2463
        %2497 = vst [vmem:[%s2493 + $0x48] sm:$0xff] %v2464
        %2498 = vst [vmem:[%s2493 + $0x80] sm:$0xff] %v2465
        %2499 = vst [vmem:[%s2493 + $0x88] sm:$0xff] %v2466
        %2500 = vst [vmem:[%s2493 + $0xc0] sm:$0xff] %v2467
        %2501 = vst [vmem:[%s2493 + $0xc8] sm:$0xff] %v2468
        %2502 = vst [vmem:[%s2493 + $0x100] sm:$0xff] %v2469
        %2503 = vst [vmem:[%s2493 + $0x108] sm:$0xff] %v2470
        %2504 = vst [vmem:[%s2493 + $0x140] sm:$0xff] %v2471
        %2505 = vst [vmem:[%s2493 + $0x148] sm:$0xff] %v2472
        %2506 = vst [vmem:[%s2493 + $0x180] sm:$0xff] %v2473
        %2507 = vst [vmem:[%s2493 + $0x188] sm:$0xff] %v2474
        %2508 = vst [vmem:[%s2493 + $0x1c0] sm:$0xff] %v2475
        %2509 = vst [vmem:[%s2493 + $0x1c8] sm:$0xff] %v2476
        %2510 = vst [vmem:[%s2493 + $0x200] sm:$0xff] %v2477
        %2511 = vst [vmem:[%s2493 + $0x208] sm:$0xff] %v2478
        %2512 = vst [vmem:[%s2493 + $0x240] sm:$0xff] %v2479
        %2513 = vst [vmem:[%s2493 + $0x248] sm:$0xff] %v2480
        %2514 = vst [vmem:[%s2493 + $0x280] sm:$0xff] %v2481
        %2515 = vst [vmem:[%s2493 + $0x288] sm:$0xff] %v2482
        %2516 = vst [vmem:[%s2493 + $0x2c0] sm:$0xff] %v2483
        %2517 = vst [vmem:[%s2493 + $0x2c8] sm:$0xff] %v2484
        %2518 = vst [vmem:[%s2493 + $0x300] sm:$0xff] %v2485
        %2519 = vst [vmem:[%s2493 + $0x308] sm:$0xff] %v2486
        %2520 = vst [vmem:[%s2493 + $0x340] sm:$0xff] %v2487
        %2521 = vst [vmem:[%s2493 + $0x348] sm:$0xff] %v2488
        %2522 = vst [vmem:[%s2493 + $0x380] sm:$0xff] %v2489
        %2523 = vst [vmem:[%s2493 + $0x388] sm:$0xff] %v2490
        %2524 = vst [vmem:[%s2493 + $0x3c0] sm:$0xff] %v2491
        %2525 = vst [vmem:[%s2493 + $0x3c8] sm:$0xff] %v2492
        %s2526 = sand.u32 %s157, 1
        %s2527 = scalar_lea.sflag [#allocation4], %s2526
        %s2528 = sand.u32 %s157, 1
        %s2529 = smul.addr %s2528, 1024
        %s2530 = scalar_lea.vmem [#allocation8], %s2529
        // Predicated region
        $region53: #{tpu_custom_call.1} parent=39 // pred_check
          %p2531 = pneg %p167
        $region54: #{tpu_custom_call.1} parent=39 // pred_check_branch
          %2533 = sbr.rel (%p2531) target = $region56
        $region55: #{tpu_custom_call.1} parent=39 // pred_region
          %s2534 = smul.u32 16, %s28
          %s2536 = ssub.s32 16384, 16384
          %2537 = vsyncadd %s2527, %s2536
          %s2538 = smul.addr %s2534, 8
          %s2539 = smul.addr %s27, 128
          %s2540 = sadd.s32 %s2538, %s2539
          %s2541 = smul.addr %s2540, 128
          %s2542 = scalar_lea.hbm %s5, %s2541
          %s2543 = sshll.u32 %s2530, 4
          %s2544 = int_to_ptr.vmem [resolvable:$true] %s2543
          %2549 = dma.vmem_to_hbm [thread:$0]  %s2544, 16384, %s2542, %s2527, 128, 128, 8
        $region56: #{tpu_custom_call.1} parent=39 // pred_fallthru
          _
      $region40: #{tpu_custom_call.1} parent=5 // pred_fallthru
        _
      %p2550 = scmp.le.s32.totalorder 2, %s18
      // Predicated region
      $region57: #{tpu_custom_call.1} parent=5 // pred_check
        %p2551 = pneg %p2550
      $region58: #{tpu_custom_call.1} parent=5 // pred_check_branch
        %2553 = sbr.rel (%p2551) target = $region60
      $region59: #{tpu_custom_call.1} parent=5 // pred_region
        %s2554 = ssub.s32 %s18, 2
        // Predicated region
        $region61: #{tpu_custom_call.1} parent=59 // pred_check
          %p2555 = pneg %p173
        $region62: #{tpu_custom_call.1} parent=59 // pred_check_branch
          %2557 = sbr.rel (%p2555) target = $region64
        $region63: #{tpu_custom_call.1} parent=59 // pred_region
          %s2558 = sand.u32 %s158, 1
          %s2559 = scalar_lea.sflag [#allocation4], %s2558
          %s2560 = sand.u32 %s158, 1
          %s2561 = smul.addr %s2560, 1024
          %s2562 = scalar_lea.vmem [#allocation8], %s2561
          %2563 = dma.done %s2559, 16384
        $region64: #{tpu_custom_call.1} parent=59 // pred_fallthru
          _
      $region60: #{tpu_custom_call.1} parent=5 // pred_fallthru
        _
    $region6: #{tpu_custom_call.1} parent=1 // loop_footer
      %s22 = sadd.s32 1, %s18
    $region7: #{tpu_custom_call.1} parent=1 // loop_footer_branch
      %17 = sbr.rel target = $region3
    $region8: #{tpu_custom_call.1} parent=1 // loop_exit
      _
    %2564 = vsyncpa [#allocation3], 1
    %s2565 = scalar_lea.sflag [#allocation3], 1
    %2566 = vsyncpa %s2565, 1
    %2567 = vsyncpa [#allocation6], 1
    %2568 = vsyncpa [#allocation4], 1
    %s2569 = scalar_lea.sflag [#allocation4], 1
    %2570 = vsyncpa %s2569, 1

</llo_original>
